<compile_context>
chip_gen: v5e
topology: v5e:2x2
jax: 0.10.0
libtpu: 0.0.40
codegen_flags: <defaults>
</compile_context>

<pallas_src>
import functools

import jax
import jax.numpy as jnp
import numpy as np
from jax.experimental import pallas as pl
from jax.experimental.pallas import tpu as pltpu

# ----------------------------- model sizes (small, synthetic) -----------------
B = 4            # batch
T = 8            # text sequence length
DT, DA, DV = 32, 16, 16          # feature_dims  (text_in, audio_in, video_in)
HT, HA, HV = 32, 4, 4            # hidden_dims   (text_hidden, audio_hidden, video_hidden)
TO = 8                           # text_out
PF = 32                          # post_fusion_dim
FUSE = (HA + 1) * (HV + 1) * (TO + 1)   # 5*5*9 = 225
FUSE_P = 256                     # FUSE padded to 2 dense vregs
BN_EPS = 1e-5
BP = 8                           # batch padded to one full sublane group
AVH = HA + HV                    # merged audio|video hidden (8)

# ------------- packed parameter slab layout (rows x 256 lanes, f32) -----------
LANES = 256
OFF_AVW1 = 0            # (32, 8)   block-diag [a_w1|v_w1], BN folded
OFF_AVW2 = 32           # (8, 8)    block-diag
OFF_AVW3 = 40           # (8, 8)    block-diag
OFF_TWIH = 48           # (32, 128) gate order [i|f|o|g]
OFF_TWHH = 80           # (32, 128)
OFF_SAW  = 112          # (8, 256)  rows 4:8 zero  (applied to av_h)
OFF_SVW  = 120          # (8, 256)  rows 0:4 zero
OFF_STW  = 128          # (32, 256) = t_wl @ st_sel (text Linear folded in)
OFF_FW1  = 160          # (256, 32)
OFF_FW2  = 416          # (32, 32)
OFF_FW3  = 448          # (32, 128) col 0 real, rest zero
OFF_BIAS = 480          # bias rows below
N_PARAM_ROWS = 496      # -> slab is (496, 256) f32  (~508 KiB, one DMA)

BI_AVB1, BI_AVB2, BI_AVB3 = 0, 1, 2
BI_TB = 3
BI_SAB, BI_SVB, BI_STB = 4, 5, 6
BI_FB1, BI_FB2, BI_FB3 = 7, 8, 9


# ----------------------------- fused Pallas kernel ---------------------------
def tfn_fused_kernel(av_ref, text_ref, p_ref, o_ref):
    H = HT

    def W(off, rows, cols):           # static slice of the packed params slab
        return p_ref[off:off + rows, :cols]

    def Bv(idx, cols):                # one bias row
        return p_ref[OFF_BIAS + idx:OFF_BIAS + idx + 1, :cols]

    def dense(x, w, b):
        return jnp.dot(x, w, preferred_element_type=jnp.float32) + b

    # ---- merged audio|video SubNet: (BN folded) -> 3x (Linear + ReLU), block-diag
    y = jnp.maximum(dense(av_ref[...], W(OFF_AVW1, DA + DV, AVH), Bv(BI_AVB1, AVH)), 0.0)
    y = jnp.maximum(dense(y, W(OFF_AVW2, AVH, AVH), Bv(BI_AVB2, AVH)), 0.0)
    av_h = jnp.maximum(dense(y, W(OFF_AVW3, AVH, AVH), Bv(BI_AVB3, AVH)), 0.0)

    # ---- TextSubNet LSTM: hoisted input projection (one MXU pass for all steps)
    gates_x = dense(text_ref[...], W(OFF_TWIH, DT, 4 * H), Bv(BI_TB, 4 * H))   # (T*BP, 4H)
    whh = W(OFF_TWHH, H, 4 * H)

    h = jnp.zeros((BP, H), jnp.float32)
    c = jnp.zeros((BP, H), jnp.float32)
    # Fully unrolled static recurrence; slices are sublane-aligned (BP = 8).
    # Gate columns were reordered host-side to [i | f | o | g].
    for t in range(T):
        gates = gates_x[t * BP:(t + 1) * BP, :] + jnp.dot(
            h, whh, preferred_element_type=jnp.float32)
        sig = jax.nn.sigmoid(gates)       # full (8,128) vreg on the EUP
        tg = jnp.tanh(gates)              # full (8,128) vreg on the EUP
        i = sig[:, :H]
        f = sig[:, H:2 * H]
        o = sig[:, 2 * H:3 * H]
        g = tg[:, 3 * H:4 * H]
        c = f * c + i * g
        h = o * jnp.tanh(c)

    # ---- Tensor fusion: [1;a] x [1;v] x [1;t] outer product flattened as
    # (ia*(HV+1)+iv)*(TO+1)+it, built with constant 0/1 selection matmuls.
    # Text output Linear is folded into st_w; FUSE padded to 256 (padded lanes = 0).
    a_exp = dense(av_h, W(OFF_SAW, AVH, FUSE_P), Bv(BI_SAB, FUSE_P))
    v_exp = dense(av_h, W(OFF_SVW, AVH, FUSE_P), Bv(BI_SVB, FUSE_P))
    t_exp = dense(h, W(OFF_STW, H, FUSE_P), Bv(BI_STB, FUSE_P))
    fusion = a_exp * v_exp * t_exp                                   # (BP, 256)

    # ---- Post-fusion MLP + sigmoid * output_range + output_shift
    y = jnp.maximum(dense(fusion, W(OFF_FW1, FUSE_P, PF), Bv(BI_FB1, PF)), 0.0)
    y = jnp.maximum(dense(y, W(OFF_FW2, PF, PF), Bv(BI_FB2, PF)), 0.0)
    y = jax.nn.sigmoid(dense(y, W(OFF_FW3, PF, 128), Bv(BI_FB3, 128)))   # 128 lanes, col 0 real
    o_ref[...] = y * 6.0 + (-3.0)


# ----------------------------- parameters ------------------------------------
def init_params(key):
    ks = iter(jax.random.split(key, 40))

    def nrm(shape, s=0.2):
        return jax.random.normal(next(ks), shape, dtype=jnp.float32) * s

    p = {}
    for pre, din, dh in (('a', DA, HA), ('v', DV, HV)):
        # BatchNorm1d eval stats: gamma=1, beta=0, mean=0, var=1 -> folded scale/shift
        p[pre + '_scale'] = jnp.full((1, din), 1.0 / np.sqrt(1.0 + BN_EPS), jnp.float32)
        p[pre + '_shift'] = jnp.zeros((1, din), jnp.float32)
        p[pre + '_w1'] = nrm((din, dh)); p[pre + '_b1'] = nrm((1, dh))
        p[pre + '_w2'] = nrm((dh, dh));  p[pre + '_b2'] = nrm((1, dh))
        p[pre + '_w3'] = nrm((dh, dh));  p[pre + '_b3'] = nrm((1, dh))
    # LSTM (weights pre-transposed to (in, out); b = b_ih + b_hh; gate order i,f,g,o)
    p['t_wih'] = nrm((DT, 4 * HT))
    p['t_whh'] = nrm((HT, 4 * HT))
    p['t_b'] = nrm((1, 4 * HT))
    p['t_wl'] = nrm((HT, TO)); p['t_bl'] = nrm((1, TO))
    # post-fusion MLP
    p['f_w1'] = nrm((FUSE, PF)); p['f_b1'] = nrm((1, PF))
    p['f_w2'] = nrm((PF, PF));   p['f_b2'] = nrm((1, PF))
    p['f_w3'] = nrm((PF, 1));    p['f_b3'] = nrm((1, 1))
    return p


def make_kernel_params(p):
    """Pack all (folded / reordered / padded) weights & biases into one (496,256) slab."""
    def n(x):
        return np.asarray(x, np.float32)

    slab = np.zeros((N_PARAM_ROWS, LANES), np.float32)

    # --- BatchNorm fold into first subnet Linear (exact in eval mode) ---------
    a_w1 = n(p['a_scale']).T * n(p['a_w1'])                  # diag(scale) @ w1
    a_b1 = n(p['a_shift']) @ n(p['a_w1']) + n(p['a_b1'])
    v_w1 = n(p['v_scale']).T * n(p['v_w1'])
    v_b1 = n(p['v_shift']) @ n(p['v_w1']) + n(p['v_b1'])

    # --- block-diagonal audio|video subnet ------------------------------------
    avw1 = np.zeros((DA + DV, AVH), np.float32)
    avw1[:DA, :HA] = a_w1
    avw1[DA:, HA:] = v_w1
    avw2 = np.zeros((AVH, AVH), np.float32)
    avw2[:HA, :HA] = n(p['a_w2'])
    avw2[HA:, HA:] = n(p['v_w2'])
    avw3 = np.zeros((AVH, AVH), np.float32)
    avw3[:HA, :HA] = n(p['a_w3'])
    avw3[HA:, HA:] = n(p['v_w3'])
    avb1 = np.concatenate([a_b1, v_b1], axis=1)
    avb2 = np.concatenate([n(p['a_b2']), n(p['v_b2'])], axis=1)
    avb3 = np.concatenate([n(p['a_b3']), n(p['v_b3'])], axis=1)

    # --- LSTM gate reorder [i|f|g|o] -> [i|f|o|g] ------------------------------
    H = HT

    def reorder(w):
        return np.concatenate([w[:, :2 * H], w[:, 3 * H:4 * H], w[:, 2 * H:3 * H]], axis=1)

    twih = reorder(n(p['t_wih']))
    twhh = reorder(n(p['t_whh']))
    tb = reorder(n(p['t_b']))

    # --- 0/1 selection matrices for the flattened fusion outer product --------
    A1, V1, T1 = HA + 1, HV + 1, TO + 1
    j = np.arange(FUSE)
    ia = j // (V1 * T1)
    iv = (j // T1) % V1
    it = j % T1

    def sel(idx, nrow):
        S = np.zeros((nrow, FUSE), np.float32)
        S[idx, j] = 1.0
        return S[1:], S[:1]          # weight rows (hidden), bias row (constant 1)

    sa_w, sa_b = sel(ia, A1)         # (4, 225), (1, 225)
    sv_w, sv_b = sel(iv, V1)         # (4, 225), (1, 225)
    st_sel_w, st_sel_b = sel(it, T1)  # (8, 225), (1, 225)

    # fold text output Linear (t_wl, t_bl) into the text selection matmul
    stw = n(p['t_wl']) @ st_sel_w                       # (32, 225)
    stb = n(p['t_bl']) @ st_sel_w + st_sel_b            # (1, 225)

    # --- fill the slab ---------------------------------------------------------
    slab[OFF_AVW1:OFF_AVW1 + DA + DV, :AVH] = avw1
    slab[OFF_AVW2:OFF_AVW2 + AVH, :AVH] = avw2
    slab[OFF_AVW3:OFF_AVW3 + AVH, :AVH] = avw3
    slab[OFF_TWIH:OFF_TWIH + DT, :4 * H] = twih
    slab[OFF_TWHH:OFF_TWHH + H, :4 * H] = twhh
    slab[OFF_SAW:OFF_SAW + HA, :FUSE] = sa_w            # rows 4:8 stay zero
    slab[OFF_SVW + HA:OFF_SVW + AVH, :FUSE] = sv_w      # rows 0:4 stay zero
    slab[OFF_STW:OFF_STW + H, :FUSE] = stw
    slab[OFF_FW1:OFF_FW1 + FUSE, :PF] = n(p['f_w1'])    # rows 225:256 stay zero
    slab[OFF_FW2:OFF_FW2 + PF, :PF] = n(p['f_w2'])
    slab[OFF_FW3:OFF_FW3 + PF, :1] = n(p['f_w3'])       # cols 1:128 stay zero

    slab[OFF_BIAS + BI_AVB1, :AVH] = avb1[0]
    slab[OFF_BIAS + BI_AVB2, :AVH] = avb2[0]
    slab[OFF_BIAS + BI_AVB3, :AVH] = avb3[0]
    slab[OFF_BIAS + BI_TB, :4 * H] = tb[0]
    slab[OFF_BIAS + BI_SAB, :FUSE] = sa_b[0]
    slab[OFF_BIAS + BI_SVB, :FUSE] = sv_b[0]
    slab[OFF_BIAS + BI_STB, :FUSE] = stb[0]
    slab[OFF_BIAS + BI_FB1, :PF] = n(p['f_b1'])[0]
    slab[OFF_BIAS + BI_FB2, :PF] = n(p['f_b2'])[0]
    slab[OFF_BIAS + BI_FB3, :1] = n(p['f_b3'])[0]

    return jnp.asarray(slab)


# ----------------------------- TFN forward (single Pallas call) ---------------
def tfn_forward(kparams, text_x, audio_x, video_x):
    audio = jnp.squeeze(audio_x, axis=1)
    video = jnp.squeeze(video_x, axis=1)
    Bn, T_, Dt = text_x.shape
    assert Bn <= BP and T_ == T and Dt == DT

    pad = BP - Bn
    if pad:
        audio = jnp.pad(audio, ((0, pad), (0, 0)))
        video = jnp.pad(video, ((0, pad), (0, 0)))
        text_x = jnp.pad(text_x, ((0, pad), (0, 0), (0, 0)))

    # lane-concat audio|video for the block-diagonal subnet; time-major text so
    # each LSTM step reads a contiguous sublane-aligned (BP, 4H) slab.
    av = jnp.concatenate([audio, video], axis=1)                     # (BP, 32)
    text_flat = jnp.transpose(text_x, (1, 0, 2)).reshape(T_ * BP, Dt)  # (T*BP, 32)

    out = pl.pallas_call(
        tfn_fused_kernel,
        out_shape=jax.ShapeDtypeStruct((BP, 128), jnp.float32),
        in_specs=[pl.BlockSpec(memory_space=pltpu.MemorySpace.VMEM)] * 3,
        out_specs=pl.BlockSpec(memory_space=pltpu.MemorySpace.VMEM),
    )(av, text_flat, kparams)
    return out[:Bn, :1]


# ----------------------------- pure-JAX reference ----------------------------
def tfn_reference(params, text_x, audio_x, video_x):
    audio_x = jnp.squeeze(audio_x, 1)
    video_x = jnp.squeeze(video_x, 1)
    Bn = text_x.shape[0]

    def subnet(x, pre):
        x = x * params[pre + '_scale'] + params[pre + '_shift']
        y = jax.nn.relu(x @ params[pre + '_w1'] + params[pre + '_b1'])
        y = jax.nn.relu(y @ params[pre + '_w2'] + params[pre + '_b2'])
        y = jax.nn.relu(y @ params[pre + '_w3'] + params[pre + '_b3'])
        return y

    audio_h = subnet(audio_x, 'a')
    video_h = subnet(video_x, 'v')

    h = jnp.zeros((Bn, HT)); c = jnp.zeros((Bn, HT))
    for t in range(text_x.shape[1]):
        gates = text_x[:, t, :] @ params['t_wih'] + h @ params['t_whh'] + params['t_b']
        i = jax.nn.sigmoid(gates[:, :HT]); f = jax.nn.sigmoid(gates[:, HT:2 * HT])
        g = jnp.tanh(gates[:, 2 * HT:3 * HT]); o = jax.nn.sigmoid(gates[:, 3 * HT:])
        c = f * c + i * g
        h = o * jnp.tanh(c)
    text_h = h @ params['t_wl'] + params['t_bl']

    ones = jnp.ones((Bn, 1))
    a_ = jnp.concatenate([ones, audio_h], 1)
    v_ = jnp.concatenate([ones, video_h], 1)
    t_ = jnp.concatenate([ones, text_h], 1)
    fusion = jnp.einsum('ba,bv->bav', a_, v_).reshape(Bn, -1)          # torch.bmm #1
    fusion = jnp.einsum('bf,bt->bft', fusion, t_).reshape(Bn, -1)      # torch.bmm #2
    y = jax.nn.relu(fusion @ params['f_w1'] + params['f_b1'])
    y = jax.nn.relu(y @ params['f_w2'] + params['f_b2'])
    y = jax.nn.sigmoid(y @ params['f_w3'] + params['f_b3'])
    return y * 6.0 - 3.0


# ----------------------------- AMIO wrapper ----------------------------------
class AMIO:
    MODEL_MAP = {'tfn': tfn_forward}

    def __init__(self, args):
        self.model_name = args['model_name']
        self.with_control = args['with_control']
        self.params = init_params(jax.random.PRNGKey(args.get('param_seed', 42)))
        self.kparams = make_kernel_params(self.params)
        self._fwd = jax.jit(functools.partial(self.MODEL_MAP[self.model_name], self.kparams))

    def __call__(self, text_x, audio_x, video_x, control_x=None, meta_info=None, Y=None):
        if self.with_control:
            # TODO(synk): control-conditioned TFN variant is not defined in the reference code.
            return self._fwd(text_x, audio_x, video_x)
        return self._fwd(text_x, audio_x, video_x)


# ----------------------------- main -------------------------------------------
if __name__ == "__main__":
    args = {'model_name': 'tfn', 'with_control': False, 'param_seed': 42}
    model = AMIO(args)

    key = jax.random.PRNGKey(0)
    k1, k2, k3 = jax.random.split(key, 3)
    text_x = jax.random.normal(k1, (B, T, DT), dtype=jnp.float32)
    audio_x = jax.random.normal(k2, (B, 1, DA), dtype=jnp.float32)
    video_x = jax.random.normal(k3, (B, 1, DV), dtype=jnp.float32)

    out = model(text_x, audio_x, video_x)
    out = jax.block_until_ready(out)

    ref = tfn_reference(model.params, text_x, audio_x, video_x)
    assert out.shape == (B, 1)
    assert np.allclose(np.asarray(out), np.asarray(ref), atol=5e-2, rtol=5e-2), (
        f"max abs diff {np.max(np.abs(np.asarray(out) - np.asarray(ref)))}")

    print("KERNEL_OK")
</pallas_src>

<mosaic_0001>
module attributes {stable_mosaic.version = 11 : i64} {
  func.func @tfn_fused_kernel(%arg0: memref<8x32xf32, #tpu.memory_space<vmem>>, %arg1: memref<64x32xf32, #tpu.memory_space<vmem>>, %arg2: memref<496x256xf32, #tpu.memory_space<vmem>>, %arg3: memref<8x128xf32, #tpu.memory_space<vmem>>) attributes {dimension_semantics = [], scalar_prefetch = 0 : i64, scratch_operands = 0 : i64, tpu.core_type = #tpu.core_type<tc>} {
    %c0 = arith.constant 0 : index
    %c0_0 = arith.constant 0 : index
    %0 = vector.load %arg0[%c0, %c0_0] : memref<8x32xf32, #tpu.memory_space<vmem>>, vector<8x32xf32>
    %c0_1 = arith.constant 0 : index
    %c0_2 = arith.constant 0 : index
    %1 = vector.load %arg2[%c0_1, %c0_2] : memref<496x256xf32, #tpu.memory_space<vmem>>, vector<32x8xf32>
    %c480 = arith.constant 480 : index
    %c0_3 = arith.constant 0 : index
    %2 = vector.load %arg2[%c480, %c0_3] : memref<496x256xf32, #tpu.memory_space<vmem>>, vector<1x8xf32>
    %cst = arith.constant dense<0.000000e+00> : vector<8x8xf32>
    %3 = tpu.matmul %0, %1, %cst {dimension_numbers = #tpu.dot_dimension_numbers<[1], [0], [0], [1], [0, 0, 1, 1], [], []>} : vector<8x32xf32>, vector<32x8xf32>, vector<8x8xf32> -> vector<8x8xf32>
    %4 = vector.broadcast %2 : vector<1x8xf32> to vector<8x8xf32>
    %5 = arith.addf %3, %4 : vector<8x8xf32>
    %cst_4 = arith.constant 0.000000e+00 : f32
    %6 = vector.broadcast %cst_4 : f32 to vector<8x8xf32>
    %7 = arith.maximumf %5, %6 : vector<8x8xf32>
    %c32 = arith.constant 32 : index
    %c0_5 = arith.constant 0 : index
    %8 = vector.load %arg2[%c32, %c0_5] : memref<496x256xf32, #tpu.memory_space<vmem>>, vector<8x8xf32>
    %c481 = arith.constant 481 : index
    %c0_6 = arith.constant 0 : index
    %9 = vector.load %arg2[%c481, %c0_6] : memref<496x256xf32, #tpu.memory_space<vmem>>, vector<1x8xf32>
    %cst_7 = arith.constant dense<0.000000e+00> : vector<8x8xf32>
    %10 = tpu.matmul %7, %8, %cst_7 {dimension_numbers = #tpu.dot_dimension_numbers<[1], [0], [0], [1], [0, 0, 1, 1], [], []>} : vector<8x8xf32>, vector<8x8xf32>, vector<8x8xf32> -> vector<8x8xf32>
    %11 = vector.broadcast %9 : vector<1x8xf32> to vector<8x8xf32>
    %12 = arith.addf %10, %11 : vector<8x8xf32>
    %cst_8 = arith.constant 0.000000e+00 : f32
    %13 = vector.broadcast %cst_8 : f32 to vector<8x8xf32>
    %14 = arith.maximumf %12, %13 : vector<8x8xf32>
    %c40 = arith.constant 40 : index
    %c0_9 = arith.constant 0 : index
    %15 = vector.load %arg2[%c40, %c0_9] : memref<496x256xf32, #tpu.memory_space<vmem>>, vector<8x8xf32>
    %c482 = arith.constant 482 : index
    %c0_10 = arith.constant 0 : index
    %16 = vector.load %arg2[%c482, %c0_10] : memref<496x256xf32, #tpu.memory_space<vmem>>, vector<1x8xf32>
    %cst_11 = arith.constant dense<0.000000e+00> : vector<8x8xf32>
    %17 = tpu.matmul %14, %15, %cst_11 {dimension_numbers = #tpu.dot_dimension_numbers<[1], [0], [0], [1], [0, 0, 1, 1], [], []>} : vector<8x8xf32>, vector<8x8xf32>, vector<8x8xf32> -> vector<8x8xf32>
    %18 = vector.broadcast %16 : vector<1x8xf32> to vector<8x8xf32>
    %19 = arith.addf %17, %18 : vector<8x8xf32>
    %cst_12 = arith.constant 0.000000e+00 : f32
    %20 = vector.broadcast %cst_12 : f32 to vector<8x8xf32>
    %21 = arith.maximumf %19, %20 : vector<8x8xf32>
    %c0_13 = arith.constant 0 : index
    %c0_14 = arith.constant 0 : index
    %22 = vector.load %arg1[%c0_13, %c0_14] : memref<64x32xf32, #tpu.memory_space<vmem>>, vector<64x32xf32>
    %c48 = arith.constant 48 : index
    %c0_15 = arith.constant 0 : index
    %23 = vector.load %arg2[%c48, %c0_15] : memref<496x256xf32, #tpu.memory_space<vmem>>, vector<32x128xf32>
    %c483 = arith.constant 483 : index
    %c0_16 = arith.constant 0 : index
    %24 = vector.load %arg2[%c483, %c0_16] : memref<496x256xf32, #tpu.memory_space<vmem>>, vector<1x128xf32>
    %cst_17 = arith.constant dense<0.000000e+00> : vector<64x128xf32>
    %25 = tpu.matmul %22, %23, %cst_17 {dimension_numbers = #tpu.dot_dimension_numbers<[1], [0], [0], [1], [0, 0, 1, 1], [], []>} : vector<64x32xf32>, vector<32x128xf32>, vector<64x128xf32> -> vector<64x128xf32>
    %26 = vector.broadcast %24 : vector<1x128xf32> to vector<64x128xf32>
    %27 = arith.addf %25, %26 : vector<64x128xf32>
    %c80 = arith.constant 80 : index
    %c0_18 = arith.constant 0 : index
    %28 = vector.load %arg2[%c80, %c0_18] : memref<496x256xf32, #tpu.memory_space<vmem>>, vector<32x128xf32>
    %cst_19 = arith.constant 0.000000e+00 : f32
    %29 = vector.broadcast %cst_19 : f32 to vector<8x32xf32>
    %cst_20 = arith.constant 0.000000e+00 : f32
    %30 = vector.broadcast %cst_20 : f32 to vector<8x32xf32>
    %31 = vector.extract_strided_slice %27 {offsets = [0, 0], sizes = [8, 128], strides = [1, 1]} : vector<64x128xf32> to vector<8x128xf32>
    %cst_21 = arith.constant dense<0.000000e+00> : vector<8x128xf32>
    %32 = tpu.matmul %29, %28, %cst_21 {dimension_numbers = #tpu.dot_dimension_numbers<[1], [0], [0], [1], [0, 0, 1, 1], [], []>} : vector<8x32xf32>, vector<32x128xf32>, vector<8x128xf32> -> vector<8x128xf32>
    %33 = arith.addf %31, %32 : vector<8x128xf32>
    %34 = arith.negf %33 : vector<8x128xf32>
    %35 = math.exp %34 : vector<8x128xf32>
    %cst_22 = arith.constant 1.000000e+00 : f32
    %36 = vector.broadcast %cst_22 : f32 to vector<8x128xf32>
    %37 = arith.addf %36, %35 : vector<8x128xf32>
    %38 = arith.divf %36, %37 : vector<8x128xf32>
    %39 = math.tanh %33 : vector<8x128xf32>
    %40 = vector.extract_strided_slice %38 {offsets = [0, 0], sizes = [8, 32], strides = [1, 1]} : vector<8x128xf32> to vector<8x32xf32>
    %41 = vector.extract_strided_slice %38 {offsets = [0, 32], sizes = [8, 32], strides = [1, 1]} : vector<8x128xf32> to vector<8x32xf32>
    %42 = vector.extract_strided_slice %38 {offsets = [0, 64], sizes = [8, 32], strides = [1, 1]} : vector<8x128xf32> to vector<8x32xf32>
    %43 = vector.extract_strided_slice %39 {offsets = [0, 96], sizes = [8, 32], strides = [1, 1]} : vector<8x128xf32> to vector<8x32xf32>
    %44 = arith.mulf %41, %30 : vector<8x32xf32>
    %45 = arith.mulf %40, %43 : vector<8x32xf32>
    %46 = arith.addf %44, %45 : vector<8x32xf32>
    %47 = math.tanh %46 : vector<8x32xf32>
    %48 = arith.mulf %42, %47 : vector<8x32xf32>
    %49 = vector.extract_strided_slice %27 {offsets = [8, 0], sizes = [8, 128], strides = [1, 1]} : vector<64x128xf32> to vector<8x128xf32>
    %cst_23 = arith.constant dense<0.000000e+00> : vector<8x128xf32>
    %50 = tpu.matmul %48, %28, %cst_23 {dimension_numbers = #tpu.dot_dimension_numbers<[1], [0], [0], [1], [0, 0, 1, 1], [], []>} : vector<8x32xf32>, vector<32x128xf32>, vector<8x128xf32> -> vector<8x128xf32>
    %51 = arith.addf %49, %50 : vector<8x128xf32>
    %52 = arith.negf %51 : vector<8x128xf32>
    %53 = math.exp %52 : vector<8x128xf32>
    %cst_24 = arith.constant 1.000000e+00 : f32
    %54 = vector.broadcast %cst_24 : f32 to vector<8x128xf32>
    %55 = arith.addf %54, %53 : vector<8x128xf32>
    %56 = arith.divf %54, %55 : vector<8x128xf32>
    %57 = math.tanh %51 : vector<8x128xf32>
    %58 = vector.extract_strided_slice %56 {offsets = [0, 0], sizes = [8, 32], strides = [1, 1]} : vector<8x128xf32> to vector<8x32xf32>
    %59 = vector.extract_strided_slice %56 {offsets = [0, 32], sizes = [8, 32], strides = [1, 1]} : vector<8x128xf32> to vector<8x32xf32>
    %60 = vector.extract_strided_slice %56 {offsets = [0, 64], sizes = [8, 32], strides = [1, 1]} : vector<8x128xf32> to vector<8x32xf32>
    %61 = vector.extract_strided_slice %57 {offsets = [0, 96], sizes = [8, 32], strides = [1, 1]} : vector<8x128xf32> to vector<8x32xf32>
    %62 = arith.mulf %59, %46 : vector<8x32xf32>
    %63 = arith.mulf %58, %61 : vector<8x32xf32>
    %64 = arith.addf %62, %63 : vector<8x32xf32>
    %65 = math.tanh %64 : vector<8x32xf32>
    %66 = arith.mulf %60, %65 : vector<8x32xf32>
    %67 = vector.extract_strided_slice %27 {offsets = [16, 0], sizes = [8, 128], strides = [1, 1]} : vector<64x128xf32> to vector<8x128xf32>
    %cst_25 = arith.constant dense<0.000000e+00> : vector<8x128xf32>
    %68 = tpu.matmul %66, %28, %cst_25 {dimension_numbers = #tpu.dot_dimension_numbers<[1], [0], [0], [1], [0, 0, 1, 1], [], []>} : vector<8x32xf32>, vector<32x128xf32>, vector<8x128xf32> -> vector<8x128xf32>
    %69 = arith.addf %67, %68 : vector<8x128xf32>
    %70 = arith.negf %69 : vector<8x128xf32>
    %71 = math.exp %70 : vector<8x128xf32>
    %cst_26 = arith.constant 1.000000e+00 : f32
    %72 = vector.broadcast %cst_26 : f32 to vector<8x128xf32>
    %73 = arith.addf %72, %71 : vector<8x128xf32>
    %74 = arith.divf %72, %73 : vector<8x128xf32>
    %75 = math.tanh %69 : vector<8x128xf32>
    %76 = vector.extract_strided_slice %74 {offsets = [0, 0], sizes = [8, 32], strides = [1, 1]} : vector<8x128xf32> to vector<8x32xf32>
    %77 = vector.extract_strided_slice %74 {offsets = [0, 32], sizes = [8, 32], strides = [1, 1]} : vector<8x128xf32> to vector<8x32xf32>
    %78 = vector.extract_strided_slice %74 {offsets = [0, 64], sizes = [8, 32], strides = [1, 1]} : vector<8x128xf32> to vector<8x32xf32>
    %79 = vector.extract_strided_slice %75 {offsets = [0, 96], sizes = [8, 32], strides = [1, 1]} : vector<8x128xf32> to vector<8x32xf32>
    %80 = arith.mulf %77, %64 : vector<8x32xf32>
    %81 = arith.mulf %76, %79 : vector<8x32xf32>
    %82 = arith.addf %80, %81 : vector<8x32xf32>
    %83 = math.tanh %82 : vector<8x32xf32>
    %84 = arith.mulf %78, %83 : vector<8x32xf32>
    %85 = vector.extract_strided_slice %27 {offsets = [24, 0], sizes = [8, 128], strides = [1, 1]} : vector<64x128xf32> to vector<8x128xf32>
    %cst_27 = arith.constant dense<0.000000e+00> : vector<8x128xf32>
    %86 = tpu.matmul %84, %28, %cst_27 {dimension_numbers = #tpu.dot_dimension_numbers<[1], [0], [0], [1], [0, 0, 1, 1], [], []>} : vector<8x32xf32>, vector<32x128xf32>, vector<8x128xf32> -> vector<8x128xf32>
    %87 = arith.addf %85, %86 : vector<8x128xf32>
    %88 = arith.negf %87 : vector<8x128xf32>
    %89 = math.exp %88 : vector<8x128xf32>
    %cst_28 = arith.constant 1.000000e+00 : f32
    %90 = vector.broadcast %cst_28 : f32 to vector<8x128xf32>
    %91 = arith.addf %90, %89 : vector<8x128xf32>
    %92 = arith.divf %90, %91 : vector<8x128xf32>
    %93 = math.tanh %87 : vector<8x128xf32>
    %94 = vector.extract_strided_slice %92 {offsets = [0, 0], sizes = [8, 32], strides = [1, 1]} : vector<8x128xf32> to vector<8x32xf32>
    %95 = vector.extract_strided_slice %92 {offsets = [0, 32], sizes = [8, 32], strides = [1, 1]} : vector<8x128xf32> to vector<8x32xf32>
    %96 = vector.extract_strided_slice %92 {offsets = [0, 64], sizes = [8, 32], strides = [1, 1]} : vector<8x128xf32> to vector<8x32xf32>
    %97 = vector.extract_strided_slice %93 {offsets = [0, 96], sizes = [8, 32], strides = [1, 1]} : vector<8x128xf32> to vector<8x32xf32>
    %98 = arith.mulf %95, %82 : vector<8x32xf32>
    %99 = arith.mulf %94, %97 : vector<8x32xf32>
    %100 = arith.addf %98, %99 : vector<8x32xf32>
    %101 = math.tanh %100 : vector<8x32xf32>
    %102 = arith.mulf %96, %101 : vector<8x32xf32>
    %103 = vector.extract_strided_slice %27 {offsets = [32, 0], sizes = [8, 128], strides = [1, 1]} : vector<64x128xf32> to vector<8x128xf32>
    %cst_29 = arith.constant dense<0.000000e+00> : vector<8x128xf32>
    %104 = tpu.matmul %102, %28, %cst_29 {dimension_numbers = #tpu.dot_dimension_numbers<[1], [0], [0], [1], [0, 0, 1, 1], [], []>} : vector<8x32xf32>, vector<32x128xf32>, vector<8x128xf32> -> vector<8x128xf32>
    %105 = arith.addf %103, %104 : vector<8x128xf32>
    %106 = arith.negf %105 : vector<8x128xf32>
    %107 = math.exp %106 : vector<8x128xf32>
    %cst_30 = arith.constant 1.000000e+00 : f32
    %108 = vector.broadcast %cst_30 : f32 to vector<8x128xf32>
    %109 = arith.addf %108, %107 : vector<8x128xf32>
    %110 = arith.divf %108, %109 : vector<8x128xf32>
    %111 = math.tanh %105 : vector<8x128xf32>
    %112 = vector.extract_strided_slice %110 {offsets = [0, 0], sizes = [8, 32], strides = [1, 1]} : vector<8x128xf32> to vector<8x32xf32>
    %113 = vector.extract_strided_slice %110 {offsets = [0, 32], sizes = [8, 32], strides = [1, 1]} : vector<8x128xf32> to vector<8x32xf32>
    %114 = vector.extract_strided_slice %110 {offsets = [0, 64], sizes = [8, 32], strides = [1, 1]} : vector<8x128xf32> to vector<8x32xf32>
    %115 = vector.extract_strided_slice %111 {offsets = [0, 96], sizes = [8, 32], strides = [1, 1]} : vector<8x128xf32> to vector<8x32xf32>
    %116 = arith.mulf %113, %100 : vector<8x32xf32>
    %117 = arith.mulf %112, %115 : vector<8x32xf32>
    %118 = arith.addf %116, %117 : vector<8x32xf32>
    %119 = math.tanh %118 : vector<8x32xf32>
    %120 = arith.mulf %114, %119 : vector<8x32xf32>
    %121 = vector.extract_strided_slice %27 {offsets = [40, 0], sizes = [8, 128], strides = [1, 1]} : vector<64x128xf32> to vector<8x128xf32>
    %cst_31 = arith.constant dense<0.000000e+00> : vector<8x128xf32>
    %122 = tpu.matmul %120, %28, %cst_31 {dimension_numbers = #tpu.dot_dimension_numbers<[1], [0], [0], [1], [0, 0, 1, 1], [], []>} : vector<8x32xf32>, vector<32x128xf32>, vector<8x128xf32> -> vector<8x128xf32>
    %123 = arith.addf %121, %122 : vector<8x128xf32>
    %124 = arith.negf %123 : vector<8x128xf32>
    %125 = math.exp %124 : vector<8x128xf32>
    %cst_32 = arith.constant 1.000000e+00 : f32
    %126 = vector.broadcast %cst_32 : f32 to vector<8x128xf32>
    %127 = arith.addf %126, %125 : vector<8x128xf32>
    %128 = arith.divf %126, %127 : vector<8x128xf32>
    %129 = math.tanh %123 : vector<8x128xf32>
    %130 = vector.extract_strided_slice %128 {offsets = [0, 0], sizes = [8, 32], strides = [1, 1]} : vector<8x128xf32> to vector<8x32xf32>
    %131 = vector.extract_strided_slice %128 {offsets = [0, 32], sizes = [8, 32], strides = [1, 1]} : vector<8x128xf32> to vector<8x32xf32>
    %132 = vector.extract_strided_slice %128 {offsets = [0, 64], sizes = [8, 32], strides = [1, 1]} : vector<8x128xf32> to vector<8x32xf32>
    %133 = vector.extract_strided_slice %129 {offsets = [0, 96], sizes = [8, 32], strides = [1, 1]} : vector<8x128xf32> to vector<8x32xf32>
    %134 = arith.mulf %131, %118 : vector<8x32xf32>
    %135 = arith.mulf %130, %133 : vector<8x32xf32>
    %136 = arith.addf %134, %135 : vector<8x32xf32>
    %137 = math.tanh %136 : vector<8x32xf32>
    %138 = arith.mulf %132, %137 : vector<8x32xf32>
    %139 = vector.extract_strided_slice %27 {offsets = [48, 0], sizes = [8, 128], strides = [1, 1]} : vector<64x128xf32> to vector<8x128xf32>
    %cst_33 = arith.constant dense<0.000000e+00> : vector<8x128xf32>
    %140 = tpu.matmul %138, %28, %cst_33 {dimension_numbers = #tpu.dot_dimension_numbers<[1], [0], [0], [1], [0, 0, 1, 1], [], []>} : vector<8x32xf32>, vector<32x128xf32>, vector<8x128xf32> -> vector<8x128xf32>
    %141 = arith.addf %139, %140 : vector<8x128xf32>
    %142 = arith.negf %141 : vector<8x128xf32>
    %143 = math.exp %142 : vector<8x128xf32>
    %cst_34 = arith.constant 1.000000e+00 : f32
    %144 = vector.broadcast %cst_34 : f32 to vector<8x128xf32>
    %145 = arith.addf %144, %143 : vector<8x128xf32>
    %146 = arith.divf %144, %145 : vector<8x128xf32>
    %147 = math.tanh %141 : vector<8x128xf32>
    %148 = vector.extract_strided_slice %146 {offsets = [0, 0], sizes = [8, 32], strides = [1, 1]} : vector<8x128xf32> to vector<8x32xf32>
    %149 = vector.extract_strided_slice %146 {offsets = [0, 32], sizes = [8, 32], strides = [1, 1]} : vector<8x128xf32> to vector<8x32xf32>
    %150 = vector.extract_strided_slice %146 {offsets = [0, 64], sizes = [8, 32], strides = [1, 1]} : vector<8x128xf32> to vector<8x32xf32>
    %151 = vector.extract_strided_slice %147 {offsets = [0, 96], sizes = [8, 32], strides = [1, 1]} : vector<8x128xf32> to vector<8x32xf32>
    %152 = arith.mulf %149, %136 : vector<8x32xf32>
    %153 = arith.mulf %148, %151 : vector<8x32xf32>
    %154 = arith.addf %152, %153 : vector<8x32xf32>
    %155 = math.tanh %154 : vector<8x32xf32>
    %156 = arith.mulf %150, %155 : vector<8x32xf32>
    %157 = vector.extract_strided_slice %27 {offsets = [56, 0], sizes = [8, 128], strides = [1, 1]} : vector<64x128xf32> to vector<8x128xf32>
    %cst_35 = arith.constant dense<0.000000e+00> : vector<8x128xf32>
    %158 = tpu.matmul %156, %28, %cst_35 {dimension_numbers = #tpu.dot_dimension_numbers<[1], [0], [0], [1], [0, 0, 1, 1], [], []>} : vector<8x32xf32>, vector<32x128xf32>, vector<8x128xf32> -> vector<8x128xf32>
    %159 = arith.addf %157, %158 : vector<8x128xf32>
    %160 = arith.negf %159 : vector<8x128xf32>
    %161 = math.exp %160 : vector<8x128xf32>
    %cst_36 = arith.constant 1.000000e+00 : f32
    %162 = vector.broadcast %cst_36 : f32 to vector<8x128xf32>
    %163 = arith.addf %162, %161 : vector<8x128xf32>
    %164 = arith.divf %162, %163 : vector<8x128xf32>
    %165 = math.tanh %159 : vector<8x128xf32>
    %166 = vector.extract_strided_slice %164 {offsets = [0, 0], sizes = [8, 32], strides = [1, 1]} : vector<8x128xf32> to vector<8x32xf32>
    %167 = vector.extract_strided_slice %164 {offsets = [0, 32], sizes = [8, 32], strides = [1, 1]} : vector<8x128xf32> to vector<8x32xf32>
    %168 = vector.extract_strided_slice %164 {offsets = [0, 64], sizes = [8, 32], strides = [1, 1]} : vector<8x128xf32> to vector<8x32xf32>
    %169 = vector.extract_strided_slice %165 {offsets = [0, 96], sizes = [8, 32], strides = [1, 1]} : vector<8x128xf32> to vector<8x32xf32>
    %170 = arith.mulf %167, %154 : vector<8x32xf32>
    %171 = arith.mulf %166, %169 : vector<8x32xf32>
    %172 = arith.addf %170, %171 : vector<8x32xf32>
    %173 = math.tanh %172 : vector<8x32xf32>
    %174 = arith.mulf %168, %173 : vector<8x32xf32>
    %c112 = arith.constant 112 : index
    %c0_37 = arith.constant 0 : index
    %175 = vector.load %arg2[%c112, %c0_37] : memref<496x256xf32, #tpu.memory_space<vmem>>, vector<8x256xf32>
    %c484 = arith.constant 484 : index
    %c0_38 = arith.constant 0 : index
    %176 = vector.load %arg2[%c484, %c0_38] : memref<496x256xf32, #tpu.memory_space<vmem>>, vector<1x256xf32>
    %cst_39 = arith.constant dense<0.000000e+00> : vector<8x256xf32>
    %177 = tpu.matmul %21, %175, %cst_39 {dimension_numbers = #tpu.dot_dimension_numbers<[1], [0], [0], [1], [0, 0, 1, 1], [], []>} : vector<8x8xf32>, vector<8x256xf32>, vector<8x256xf32> -> vector<8x256xf32>
    %178 = vector.broadcast %176 : vector<1x256xf32> to vector<8x256xf32>
    %179 = arith.addf %177, %178 : vector<8x256xf32>
    %c120 = arith.constant 120 : index
    %c0_40 = arith.constant 0 : index
    %180 = vector.load %arg2[%c120, %c0_40] : memref<496x256xf32, #tpu.memory_space<vmem>>, vector<8x256xf32>
    %c485 = arith.constant 485 : index
    %c0_41 = arith.constant 0 : index
    %181 = vector.load %arg2[%c485, %c0_41] : memref<496x256xf32, #tpu.memory_space<vmem>>, vector<1x256xf32>
    %cst_42 = arith.constant dense<0.000000e+00> : vector<8x256xf32>
    %182 = tpu.matmul %21, %180, %cst_42 {dimension_numbers = #tpu.dot_dimension_numbers<[1], [0], [0], [1], [0, 0, 1, 1], [], []>} : vector<8x8xf32>, vector<8x256xf32>, vector<8x256xf32> -> vector<8x256xf32>
    %183 = vector.broadcast %181 : vector<1x256xf32> to vector<8x256xf32>
    %184 = arith.addf %182, %183 : vector<8x256xf32>
    %c128 = arith.constant 128 : index
    %c0_43 = arith.constant 0 : index
    %185 = vector.load %arg2[%c128, %c0_43] : memref<496x256xf32, #tpu.memory_space<vmem>>, vector<32x256xf32>
    %c486 = arith.constant 486 : index
    %c0_44 = arith.constant 0 : index
    %186 = vector.load %arg2[%c486, %c0_44] : memref<496x256xf32, #tpu.memory_space<vmem>>, vector<1x256xf32>
    %cst_45 = arith.constant dense<0.000000e+00> : vector<8x256xf32>
    %187 = tpu.matmul %174, %185, %cst_45 {dimension_numbers = #tpu.dot_dimension_numbers<[1], [0], [0], [1], [0, 0, 1, 1], [], []>} : vector<8x32xf32>, vector<32x256xf32>, vector<8x256xf32> -> vector<8x256xf32>
    %188 = vector.broadcast %186 : vector<1x256xf32> to vector<8x256xf32>
    %189 = arith.addf %187, %188 : vector<8x256xf32>
    %190 = arith.mulf %179, %184 : vector<8x256xf32>
    %191 = arith.mulf %190, %189 : vector<8x256xf32>
    %c160 = arith.constant 160 : index
    %c0_46 = arith.constant 0 : index
    %192 = vector.load %arg2[%c160, %c0_46] : memref<496x256xf32, #tpu.memory_space<vmem>>, vector<256x32xf32>
    %c487 = arith.constant 487 : index
    %c0_47 = arith.constant 0 : index
    %193 = vector.load %arg2[%c487, %c0_47] : memref<496x256xf32, #tpu.memory_space<vmem>>, vector<1x32xf32>
    %cst_48 = arith.constant dense<0.000000e+00> : vector<8x32xf32>
    %194 = tpu.matmul %191, %192, %cst_48 {dimension_numbers = #tpu.dot_dimension_numbers<[1], [0], [0], [1], [0, 0, 1, 1], [], []>} : vector<8x256xf32>, vector<256x32xf32>, vector<8x32xf32> -> vector<8x32xf32>
    %195 = vector.broadcast %193 : vector<1x32xf32> to vector<8x32xf32>
    %196 = arith.addf %194, %195 : vector<8x32xf32>
    %cst_49 = arith.constant 0.000000e+00 : f32
    %197 = vector.broadcast %cst_49 : f32 to vector<8x32xf32>
    %198 = arith.maximumf %196, %197 : vector<8x32xf32>
    %c416 = arith.constant 416 : index
    %c0_50 = arith.constant 0 : index
    %199 = vector.load %arg2[%c416, %c0_50] : memref<496x256xf32, #tpu.memory_space<vmem>>, vector<32x32xf32>
    %c488 = arith.constant 488 : index
    %c0_51 = arith.constant 0 : index
    %200 = vector.load %arg2[%c488, %c0_51] : memref<496x256xf32, #tpu.memory_space<vmem>>, vector<1x32xf32>
    %cst_52 = arith.constant dense<0.000000e+00> : vector<8x32xf32>
    %201 = tpu.matmul %198, %199, %cst_52 {dimension_numbers = #tpu.dot_dimension_numbers<[1], [0], [0], [1], [0, 0, 1, 1], [], []>} : vector<8x32xf32>, vector<32x32xf32>, vector<8x32xf32> -> vector<8x32xf32>
    %202 = vector.broadcast %200 : vector<1x32xf32> to vector<8x32xf32>
    %203 = arith.addf %201, %202 : vector<8x32xf32>
    %cst_53 = arith.constant 0.000000e+00 : f32
    %204 = vector.broadcast %cst_53 : f32 to vector<8x32xf32>
    %205 = arith.maximumf %203, %204 : vector<8x32xf32>
    %c448 = arith.constant 448 : index
    %c0_54 = arith.constant 0 : index
    %206 = vector.load %arg2[%c448, %c0_54] : memref<496x256xf32, #tpu.memory_space<vmem>>, vector<32x128xf32>
    %c489 = arith.constant 489 : index
    %c0_55 = arith.constant 0 : index
    %207 = vector.load %arg2[%c489, %c0_55] : memref<496x256xf32, #tpu.memory_space<vmem>>, vector<1x128xf32>
    %cst_56 = arith.constant dense<0.000000e+00> : vector<8x128xf32>
    %208 = tpu.matmul %205, %206, %cst_56 {dimension_numbers = #tpu.dot_dimension_numbers<[1], [0], [0], [1], [0, 0, 1, 1], [], []>} : vector<8x32xf32>, vector<32x128xf32>, vector<8x128xf32> -> vector<8x128xf32>
    %209 = vector.broadcast %207 : vector<1x128xf32> to vector<8x128xf32>
    %210 = arith.addf %208, %209 : vector<8x128xf32>
    %211 = arith.negf %210 : vector<8x128xf32>
    %212 = math.exp %211 : vector<8x128xf32>
    %cst_57 = arith.constant 1.000000e+00 : f32
    %213 = vector.broadcast %cst_57 : f32 to vector<8x128xf32>
    %214 = arith.addf %213, %212 : vector<8x128xf32>
    %215 = arith.divf %213, %214 : vector<8x128xf32>
    %cst_58 = arith.constant 6.000000e+00 : f32
    %216 = vector.broadcast %cst_58 : f32 to vector<8x128xf32>
    %217 = arith.mulf %215, %216 : vector<8x128xf32>
    %cst_59 = arith.constant -3.000000e+00 : f32
    %218 = vector.broadcast %cst_59 : f32 to vector<8x128xf32>
    %219 = arith.addf %217, %218 : vector<8x128xf32>
    %c0_60 = arith.constant 0 : index
    %c0_61 = arith.constant 0 : index
    %220 = vector.load %arg3[%c0_60, %c0_61] : memref<8x128xf32, #tpu.memory_space<vmem>>, vector<8x128xf32>
    tpu.vector_store %arg3[%c0_60, %c0_61], %219 {strides = array<i32>} : memref<8x128xf32, #tpu.memory_space<vmem>>, vector<8x128xf32>,
    return
  }
}

</mosaic_0001>

<llo_original>
// kernel: tfn_forward.1
$region0: #{tfn_forward.1}
  #allocation0 [shape = 'u32[]', space=smem, size = 0x4, offset = 0x4, fixed_abs, tag = 'smem constant byte address 0x4 - core index']
  #allocation1 [shape = 'u32[72,128]{1,0:T(1,128)}', space=vmem, size = 0x9000, scoped, tag = 'internal scratch']
  %s0 = inlined_call_operand.vmem [shape: f32[8,32], index: 0, kind: input, shape index: {}]
  %s1 = inlined_call_operand.vmem [shape: f32[64,32], index: 1, kind: input, shape index: {}]
  %s2 = inlined_call_operand.hbm [shape: f32[496,256], index: 2, kind: input, shape index: {}]
  %s3 = inlined_call_operand.vmem [shape: f32[8,128], index: 3, kind: output, shape index: {}]
  %s4 = sld [smem:[#allocation0]]
  $region26: #{tfn_forward.1} parent=0
    _
  %s6 = ssub.s32 1, %s4
  %s7 = scalar_select 0, %s6, %s4
  $region1: #{tfn_forward.1} parent=0
    #allocation2 [shape = 'u8[507904]{0}', space=vmem, size = 0x7c000, scoped, tag = 'input window, operand 2, single buffered']
    #allocation3 [shape = 's32[1]{0}', space=sflag, size = 0x4, scoped, tag = 'scoped memory for tfn_forward.1']
    %8 = vsyncpa [#allocation3], 0
    // Predicated region
    $region2: #{tfn_forward.1} parent=1 // pred_check
      _
    $region3: #{tfn_forward.1} parent=1 // pred_check_branch
      %10 = sbr.rel (0) target = $region5
    $region4: #{tfn_forward.1} parent=1 // pred_region
      _
    $region5: #{tfn_forward.1} parent=1 // pred_fallthru
      _
    // Predicated region
    $region6: #{tfn_forward.1} parent=1 // pred_check
      _
    $region7: #{tfn_forward.1} parent=1 // pred_check_branch
      %12 = sbr.rel (0) target = $region9
    $region8: #{tfn_forward.1} parent=1 // pred_region
      _
    $region9: #{tfn_forward.1} parent=1 // pred_fallthru
      _
    // Predicated region
    $region10: #{tfn_forward.1} parent=1 // pred_check
      _
    $region11: #{tfn_forward.1} parent=1 // pred_check_branch
      %14 = sbr.rel (0) target = $region13
    $region12: #{tfn_forward.1} parent=1 // pred_region
      %16 = vsyncadd [#allocation3], 0
      %s17 = sshll.u32 %s2, 4
      %s18 = int_to_ptr.hbm [resolvable:$true] %s17
      %s19 = sshll.u32 [#allocation2], 4
      %s20 = int_to_ptr.vmem [resolvable:$true] %s19
      %25 = dma.hbm_to_vmem [thread:$0]  %s18, 15872, %s20, [#allocation3], 256, 256, 16
    $region13: #{tfn_forward.1} parent=1 // pred_fallthru
      _
    // Predicated region
    $region14: #{tfn_forward.1} parent=1 // pred_check
      _
    $region15: #{tfn_forward.1} parent=1 // pred_check_branch
      %27 = sbr.rel (0) target = $region17
    $region16: #{tfn_forward.1} parent=1 // pred_region
      %29 = dma.done [#allocation3], 15872
    $region17: #{tfn_forward.1} parent=1 // pred_fallthru
      _
    %v30 = vld [vmem:[%s0] sm:$0xff]
    %v31 = vld [vmem:[#allocation2] sm:$0xff]
    %v32 = vld [vmem:[#allocation2 + $0x10] sm:$0xff]
    %v33 = vld [vmem:[#allocation2 + $0x20] sm:$0xff]
    %v34 = vld [vmem:[#allocation2 + $0x30] sm:$0xff]
    %v35 = vld [vmem:[#allocation2 + $0x3c0] ss:$0 sm:$0xff]
    %vm36 = vcmask 261120
    %v38 = vsel %vm36, %v30, 0
    %40 = vmatpush.msra.mxu0 0.0
    %41 = vmatpush.msra.mxu0 0.0
    %42 = vmatpush.msra.mxu0 0.0
    %43 = vmatpush.msra.mxu0 0.0
    %44 = vmatpush.msra.mxu0 0.0
    %45 = vmatpush.msra.mxu0 0.0
    %46 = vmatpush.msra.mxu0 0.0
    %47 = vmatpush.msra.mxu0 0.0
    %48 = vmatpush.msra.mxu0 0.0
    %49 = vmatpush.msra.mxu0 0.0
    %50 = vmatpush.msra.mxu0 0.0
    %51 = vmatpush.msra.mxu0 0.0
    %52 = vmatpush.msra.mxu0 %v34
    %53 = vmatpush.msra.mxu0 %v33
    %54 = vmatpush.msra.mxu0 %v32
    %55 = vmatpush.msra.mxu0 %v31
    %56 = vmatmul.f32.gmra.mxu0 %v38
    %v57 = vpop.f32.mrf.mxu0
    %v58 = vadd.f32 %v35, %v57
    %59 = vdwg.mxu0
    %v60 = vmax.f32 %v58, 0.0
    %v61 = vld [vmem:[#allocation2 + $0x40] sm:$0xff]
    %v62 = vld [vmem:[#allocation2 + $0x3c1] ss:$0 sm:$0xff]
    %vm63 = vcmask 64512
    %v65 = vsel %vm63, %v60, 0
    %67 = vmatpush.msra.mxu0 0.0
    %68 = vmatpush.msra.mxu0 0.0
    %69 = vmatpush.msra.mxu0 0.0
    %70 = vmatpush.msra.mxu0 0.0
    %71 = vmatpush.msra.mxu0 0.0
    %72 = vmatpush.msra.mxu0 0.0
    %73 = vmatpush.msra.mxu0 0.0
    %74 = vmatpush.msra.mxu0 0.0
    %75 = vmatpush.msra.mxu0 0.0
    %76 = vmatpush.msra.mxu0 0.0
    %77 = vmatpush.msra.mxu0 0.0
    %78 = vmatpush.msra.mxu0 0.0
    %79 = vmatpush.msra.mxu0 0.0
    %80 = vmatpush.msra.mxu0 0.0
    %81 = vmatpush.msra.mxu0 0.0
    %82 = vmatpush.msra.mxu0 %v61
    %83 = vmatmul.f32.gmra.mxu0 %v65
    %v84 = vpop.f32.mrf.mxu0
    %v85 = vadd.f32 %v62, %v84
    %86 = vdwg.mxu0
    %v87 = vmax.f32 %v85, 0.0
    %v88 = vld [vmem:[#allocation2 + $0x50] sm:$0xff]
    %v89 = vld [vmem:[#allocation2 + $0x3c2] ss:$0 sm:$0xff]
    %v91 = vsel %vm63, %v87, 0
    %93 = vmatpush.msra.mxu0 0.0
    %94 = vmatpush.msra.mxu0 0.0
    %95 = vmatpush.msra.mxu0 0.0
    %96 = vmatpush.msra.mxu0 0.0
    %97 = vmatpush.msra.mxu0 0.0
    %98 = vmatpush.msra.mxu0 0.0
    %99 = vmatpush.msra.mxu0 0.0
    %100 = vmatpush.msra.mxu0 0.0
    %101 = vmatpush.msra.mxu0 0.0
    %102 = vmatpush.msra.mxu0 0.0
    %103 = vmatpush.msra.mxu0 0.0
    %104 = vmatpush.msra.mxu0 0.0
    %105 = vmatpush.msra.mxu0 0.0
    %106 = vmatpush.msra.mxu0 0.0
    %107 = vmatpush.msra.mxu0 0.0
    %108 = vmatpush.msra.mxu0 %v88
    %109 = vmatmul.f32.gmra.mxu0 %v91
    %v110 = vpop.f32.mrf.mxu0
    %v111 = vadd.f32 %v89, %v110
    %112 = vdwg.mxu0
    %v113 = vmax.f32 %v111, 0.0
    %v114 = vld [vmem:[%s1] sm:$0xff]
    %v115 = vld [vmem:[%s1 + $0x8] sm:$0xff]
    %v116 = vld [vmem:[%s1 + $0x10] sm:$0xff]
    %v117 = vld [vmem:[%s1 + $0x18] sm:$0xff]
    %v118 = vld [vmem:[%s1 + $0x20] sm:$0xff]
    %v119 = vld [vmem:[%s1 + $0x28] sm:$0xff]
    %v120 = vld [vmem:[%s1 + $0x30] sm:$0xff]
    %v121 = vld [vmem:[%s1 + $0x38] sm:$0xff]
    %v122 = vld [vmem:[#allocation2 + $0x60] sm:$0xff]
    %v123 = vld [vmem:[#allocation2 + $0x70] sm:$0xff]
    %v124 = vld [vmem:[#allocation2 + $0x80] sm:$0xff]
    %v125 = vld [vmem:[#allocation2 + $0x90] sm:$0xff]
    %v126 = vld [vmem:[#allocation2 + $0x3c3] ss:$0 sm:$0xff]
    %v128 = vsel %vm36, %v114, 0
    %v131 = vsel %vm36, %v115, 0
    %v134 = vsel %vm36, %v116, 0
    %v137 = vsel %vm36, %v117, 0
    %v140 = vsel %vm36, %v118, 0
    %v143 = vsel %vm36, %v119, 0
    %v146 = vsel %vm36, %v120, 0
    %v149 = vsel %vm36, %v121, 0
    %151 = vmatpush.msra.mxu0 0.0
    %152 = vmatpush.msra.mxu0 0.0
    %153 = vmatpush.msra.mxu0 0.0
    %154 = vmatpush.msra.mxu0 0.0
    %155 = vmatpush.msra.mxu0 0.0
    %156 = vmatpush.msra.mxu0 0.0
    %157 = vmatpush.msra.mxu0 0.0
    %158 = vmatpush.msra.mxu0 0.0
    %159 = vmatpush.msra.mxu0 0.0
    %160 = vmatpush.msra.mxu0 0.0
    %161 = vmatpush.msra.mxu0 0.0
    %162 = vmatpush.msra.mxu0 0.0
    %163 = vmatpush.msra.mxu0 %v125
    %164 = vmatpush.msra.mxu0 %v124
    %165 = vmatpush.msra.mxu0 %v123
    %166 = vmatpush.msra.mxu0 %v122
    %167 = vmatmul.f32.gmra.mxu0 %v128
    %v168 = vpop.f32.mrf.mxu0
    %v169 = vadd.f32 %v126, %v168
    %170 = vmatmul.f32.gmra.mxu0 %v131
    %v171 = vpop.f32.mrf.mxu0
    %v172 = vadd.f32 %v126, %v171
    %173 = vmatmul.f32.gmra.mxu0 %v134
    %v174 = vpop.f32.mrf.mxu0
    %v175 = vadd.f32 %v126, %v174
    %176 = vmatmul.f32.gmra.mxu0 %v137
    %v177 = vpop.f32.mrf.mxu0
    %v178 = vadd.f32 %v126, %v177
    %179 = vmatmul.f32.gmra.mxu0 %v140
    %v180 = vpop.f32.mrf.mxu0
    %v181 = vadd.f32 %v126, %v180
    %182 = vmatmul.f32.gmra.mxu0 %v143
    %v183 = vpop.f32.mrf.mxu0
    %v184 = vadd.f32 %v126, %v183
    %185 = vmatmul.f32.gmra.mxu0 %v146
    %v186 = vpop.f32.mrf.mxu0
    %v187 = vadd.f32 %v126, %v186
    %188 = vmatmul.f32.gmra.mxu0 %v149
    %v189 = vpop.f32.mrf.mxu0
    %v190 = vadd.f32 %v126, %v189
    %191 = vdwg.mxu0
    %v192 = vld [vmem:[#allocation2 + $0xa0] sm:$0xff]
    %v193 = vld [vmem:[#allocation2 + $0xb0] sm:$0xff]
    %v194 = vld [vmem:[#allocation2 + $0xc0] sm:$0xff]
    %v195 = vld [vmem:[#allocation2 + $0xd0] sm:$0xff]
    %v197 = vsel %vm36, 0.0, 0
    %199 = vmatpush.msra.mxu0 0.0
    %200 = vmatpush.msra.mxu0 0.0
    %201 = vmatpush.msra.mxu0 0.0
    %202 = vmatpush.msra.mxu0 0.0
    %203 = vmatpush.msra.mxu0 0.0
    %204 = vmatpush.msra.mxu0 0.0
    %205 = vmatpush.msra.mxu0 0.0
    %206 = vmatpush.msra.mxu0 0.0
    %207 = vmatpush.msra.mxu0 0.0
    %208 = vmatpush.msra.mxu0 0.0
    %209 = vmatpush.msra.mxu0 0.0
    %210 = vmatpush.msra.mxu0 0.0
    %211 = vmatpush.msra.mxu0 %v195
    %212 = vmatpush.msra.mxu0 %v194
    %213 = vmatpush.msra.mxu0 %v193
    %214 = vmatpush.msra.mxu0 %v192
    %215 = vmatmul.f32.gmra.mxu0 %v197
    %v216 = vpop.f32.mrf.mxu0
    %v217 = vadd.f32 0.0, %v216
    %218 = vdwg.mxu0
    %v219 = vadd.f32 %v169, %v217
    %v220 = vxor.u32 %v219, 2147483648
    %v221 = vmul.f32 %v220, 1.442695
    %v222 = vpow.pop %v221
    %v223 = vadd.f32 %v222, 1.0
    %v224 = vrcp.pop %v223
    %v225 = vmul.f32 %v223, %v224
    %v226 = vsub.f32 1.0, %v225
    %v227 = vmul.f32 %v224, %v226
    %v228 = vadd.f32 %v224, %v227
    %vm229 = vweird.f32 %v223
    %vm230 = vweird.f32 %v224
    %vm231 = vmor %vm229, %vm230
    %v232 = vsel %vm231, %v224, %v228
    %v233 = vand.u32 2147483647, %v223
    %vm234 = vcmp.eq.f32.partialorder %v233, 8.507059e+37
    %v235 = vand.u32 %v223, 2147483648
    %v236 = vor.u32 1.1754944e-38, %v235
    %v237 = vsel %vm234, %v236, %v232
    %v238 = vmul.f32 1.0, %v237
    %v239 = vtanh.pop %v219
    %v240 = vmul.f32 %v238, 0.0
    %242 = vrot.lane.b32.xlu0 %v239, 32
    %v243 = vpop.permute.xlu0 %242
    %v245 = vmul.f32 %v238, %v243
    %247 = vrot.lane.b32.xlu0 %v245, 32
    %v248 = vpop.permute.xlu0 %247
    %v250 = vadd.f32 %v240, %v248
    %v251 = vtanh.pop %v250
    %253 = vrot.lane.b32.xlu0 %v251, 32
    %v254 = vpop.permute.xlu0 %253
    %v256 = vmul.f32 %v238, %v254
    %258 = vrot.lane.b32.xlu0 %v256, 64
    %v259 = vpop.permute.xlu0 %258
    %v260 = vsel %vm36, %v259, 0
    %262 = vmatpush.msra.mxu0 0.0
    %263 = vmatpush.msra.mxu0 0.0
    %264 = vmatpush.msra.mxu0 0.0
    %265 = vmatpush.msra.mxu0 0.0
    %266 = vmatpush.msra.mxu0 0.0
    %267 = vmatpush.msra.mxu0 0.0
    %268 = vmatpush.msra.mxu0 0.0
    %269 = vmatpush.msra.mxu0 0.0
    %270 = vmatpush.msra.mxu0 0.0
    %271 = vmatpush.msra.mxu0 0.0
    %272 = vmatpush.msra.mxu0 0.0
    %273 = vmatpush.msra.mxu0 0.0
    %274 = vmatpush.msra.mxu0 %v195
    %275 = vmatpush.msra.mxu0 %v194
    %276 = vmatpush.msra.mxu0 %v193
    %277 = vmatpush.msra.mxu0 %v192
    %278 = vmatmul.f32.gmra.mxu0 %v260
    %v279 = vpop.f32.mrf.mxu0
    %v280 = vadd.f32 0.0, %v279
    %281 = vdwg.mxu0
    %v282 = vadd.f32 %v172, %v280
    %v283 = vxor.u32 %v282, 2147483648
    %v284 = vmul.f32 %v283, 1.442695
    %v285 = vpow.pop %v284
    %v286 = vadd.f32 %v285, 1.0
    %v287 = vrcp.pop %v286
    %v288 = vmul.f32 %v286, %v287
    %v289 = vsub.f32 1.0, %v288
    %v290 = vmul.f32 %v287, %v289
    %v291 = vadd.f32 %v287, %v290
    %vm292 = vweird.f32 %v286
    %vm293 = vweird.f32 %v287
    %vm294 = vmor %vm292, %vm293
    %v295 = vsel %vm294, %v287, %v291
    %v296 = vand.u32 2147483647, %v286
    %vm297 = vcmp.eq.f32.partialorder %v296, 8.507059e+37
    %v298 = vand.u32 %v286, 2147483648
    %v299 = vor.u32 1.1754944e-38, %v298
    %v300 = vsel %vm297, %v299, %v295
    %v301 = vmul.f32 1.0, %v300
    %v302 = vtanh.pop %v282
    %v303 = vmul.f32 %v301, %v250
    %305 = vrot.lane.b32.xlu0 %v302, 32
    %v306 = vpop.permute.xlu0 %305
    %v308 = vmul.f32 %v301, %v306
    %310 = vrot.lane.b32.xlu0 %v308, 32
    %v311 = vpop.permute.xlu0 %310
    %v313 = vadd.f32 %v303, %v311
    %v314 = vtanh.pop %v313
    %316 = vrot.lane.b32.xlu0 %v314, 32
    %v317 = vpop.permute.xlu0 %316
    %v319 = vmul.f32 %v301, %v317
    %321 = vrot.lane.b32.xlu0 %v319, 64
    %v322 = vpop.permute.xlu0 %321
    %v323 = vsel %vm36, %v322, 0
    %325 = vmatpush.msra.mxu0 0.0
    %326 = vmatpush.msra.mxu0 0.0
    %327 = vmatpush.msra.mxu0 0.0
    %328 = vmatpush.msra.mxu0 0.0
    %329 = vmatpush.msra.mxu0 0.0
    %330 = vmatpush.msra.mxu0 0.0
    %331 = vmatpush.msra.mxu0 0.0
    %332 = vmatpush.msra.mxu0 0.0
    %333 = vmatpush.msra.mxu0 0.0
    %334 = vmatpush.msra.mxu0 0.0
    %335 = vmatpush.msra.mxu0 0.0
    %336 = vmatpush.msra.mxu0 0.0
    %337 = vmatpush.msra.mxu0 %v195
    %338 = vmatpush.msra.mxu0 %v194
    %339 = vmatpush.msra.mxu0 %v193
    %340 = vmatpush.msra.mxu0 %v192
    %341 = vmatmul.f32.gmra.mxu0 %v323
    %v342 = vpop.f32.mrf.mxu0
    %v343 = vadd.f32 0.0, %v342
    %344 = vdwg.mxu0
    %v345 = vadd.f32 %v175, %v343
    %v346 = vxor.u32 %v345, 2147483648
    %v347 = vmul.f32 %v346, 1.442695
    %v348 = vpow.pop %v347
    %v349 = vadd.f32 %v348, 1.0
    %v350 = vrcp.pop %v349
    %v351 = vmul.f32 %v349, %v350
    %v352 = vsub.f32 1.0, %v351
    %v353 = vmul.f32 %v350, %v352
    %v354 = vadd.f32 %v350, %v353
    %vm355 = vweird.f32 %v349
    %vm356 = vweird.f32 %v350
    %vm357 = vmor %vm355, %vm356
    %v358 = vsel %vm357, %v350, %v354
    %v359 = vand.u32 2147483647, %v349
    %vm360 = vcmp.eq.f32.partialorder %v359, 8.507059e+37
    %v361 = vand.u32 %v349, 2147483648
    %v362 = vor.u32 1.1754944e-38, %v361
    %v363 = vsel %vm360, %v362, %v358
    %v364 = vmul.f32 1.0, %v363
    %v365 = vtanh.pop %v345
    %v366 = vmul.f32 %v364, %v313
    %368 = vrot.lane.b32.xlu0 %v365, 32
    %v369 = vpop.permute.xlu0 %368
    %v371 = vmul.f32 %v364, %v369
    %373 = vrot.lane.b32.xlu0 %v371, 32
    %v374 = vpop.permute.xlu0 %373
    %v376 = vadd.f32 %v366, %v374
    %v377 = vtanh.pop %v376
    %379 = vrot.lane.b32.xlu0 %v377, 32
    %v380 = vpop.permute.xlu0 %379
    %v382 = vmul.f32 %v364, %v380
    %384 = vrot.lane.b32.xlu0 %v382, 64
    %v385 = vpop.permute.xlu0 %384
    %v386 = vsel %vm36, %v385, 0
    %388 = vmatpush.msra.mxu0 0.0
    %389 = vmatpush.msra.mxu0 0.0
    %390 = vmatpush.msra.mxu0 0.0
    %391 = vmatpush.msra.mxu0 0.0
    %392 = vmatpush.msra.mxu0 0.0
    %393 = vmatpush.msra.mxu0 0.0
    %394 = vmatpush.msra.mxu0 0.0
    %395 = vmatpush.msra.mxu0 0.0
    %396 = vmatpush.msra.mxu0 0.0
    %397 = vmatpush.msra.mxu0 0.0
    %398 = vmatpush.msra.mxu0 0.0
    %399 = vmatpush.msra.mxu0 0.0
    %400 = vmatpush.msra.mxu0 %v195
    %401 = vmatpush.msra.mxu0 %v194
    %402 = vmatpush.msra.mxu0 %v193
    %403 = vmatpush.msra.mxu0 %v192
    %404 = vmatmul.f32.gmra.mxu0 %v386
    %v405 = vpop.f32.mrf.mxu0
    %v406 = vadd.f32 0.0, %v405
    %407 = vdwg.mxu0
    %v408 = vadd.f32 %v178, %v406
    %v409 = vxor.u32 %v408, 2147483648
    %v410 = vmul.f32 %v409, 1.442695
    %v411 = vpow.pop %v410
    %v412 = vadd.f32 %v411, 1.0
    %v413 = vrcp.pop %v412
    %v414 = vmul.f32 %v412, %v413
    %v415 = vsub.f32 1.0, %v414
    %v416 = vmul.f32 %v413, %v415
    %v417 = vadd.f32 %v413, %v416
    %vm418 = vweird.f32 %v412
    %vm419 = vweird.f32 %v413
    %vm420 = vmor %vm418, %vm419
    %v421 = vsel %vm420, %v413, %v417
    %v422 = vand.u32 2147483647, %v412
    %vm423 = vcmp.eq.f32.partialorder %v422, 8.507059e+37
    %v424 = vand.u32 %v412, 2147483648
    %v425 = vor.u32 1.1754944e-38, %v424
    %v426 = vsel %vm423, %v425, %v421
    %v427 = vmul.f32 1.0, %v426
    %v428 = vtanh.pop %v408
    %v429 = vmul.f32 %v427, %v376
    %431 = vrot.lane.b32.xlu0 %v428, 32
    %v432 = vpop.permute.xlu0 %431
    %v434 = vmul.f32 %v427, %v432
    %436 = vrot.lane.b32.xlu0 %v434, 32
    %v437 = vpop.permute.xlu0 %436
    %v439 = vadd.f32 %v429, %v437
    %v440 = vtanh.pop %v439
    %442 = vrot.lane.b32.xlu0 %v440, 32
    %v443 = vpop.permute.xlu0 %442
    %v445 = vmul.f32 %v427, %v443
    %447 = vrot.lane.b32.xlu0 %v445, 64
    %v448 = vpop.permute.xlu0 %447
    %v449 = vsel %vm36, %v448, 0
    %451 = vmatpush.msra.mxu0 0.0
    %452 = vmatpush.msra.mxu0 0.0
    %453 = vmatpush.msra.mxu0 0.0
    %454 = vmatpush.msra.mxu0 0.0
    %455 = vmatpush.msra.mxu0 0.0
    %456 = vmatpush.msra.mxu0 0.0
    %457 = vmatpush.msra.mxu0 0.0
    %458 = vmatpush.msra.mxu0 0.0
    %459 = vmatpush.msra.mxu0 0.0
    %460 = vmatpush.msra.mxu0 0.0
    %461 = vmatpush.msra.mxu0 0.0
    %462 = vmatpush.msra.mxu0 0.0
    %463 = vmatpush.msra.mxu0 %v195
    %464 = vmatpush.msra.mxu0 %v194
    %465 = vmatpush.msra.mxu0 %v193
    %466 = vmatpush.msra.mxu0 %v192
    %467 = vmatmul.f32.gmra.mxu0 %v449
    %v468 = vpop.f32.mrf.mxu0
    %v469 = vadd.f32 0.0, %v468
    %470 = vdwg.mxu0
    %v471 = vadd.f32 %v181, %v469
    %v472 = vxor.u32 %v471, 2147483648
    %v473 = vmul.f32 %v472, 1.442695
    %v474 = vpow.pop %v473
    %v475 = vadd.f32 %v474, 1.0
    %v476 = vrcp.pop %v475
    %v477 = vmul.f32 %v475, %v476
    %v478 = vsub.f32 1.0, %v477
    %v479 = vmul.f32 %v476, %v478
    %v480 = vadd.f32 %v476, %v479
    %vm481 = vweird.f32 %v475
    %vm482 = vweird.f32 %v476
    %vm483 = vmor %vm481, %vm482
    %v484 = vsel %vm483, %v476, %v480
    %v485 = vand.u32 2147483647, %v475
    %vm486 = vcmp.eq.f32.partialorder %v485, 8.507059e+37
    %v487 = vand.u32 %v475, 2147483648
    %v488 = vor.u32 1.1754944e-38, %v487
    %v489 = vsel %vm486, %v488, %v484
    %v490 = vmul.f32 1.0, %v489
    %v491 = vtanh.pop %v471
    %v492 = vmul.f32 %v490, %v439
    %494 = vrot.lane.b32.xlu0 %v491, 32
    %v495 = vpop.permute.xlu0 %494
    %v497 = vmul.f32 %v490, %v495
    %499 = vrot.lane.b32.xlu0 %v497, 32
    %v500 = vpop.permute.xlu0 %499
    %v502 = vadd.f32 %v492, %v500
    %v503 = vtanh.pop %v502
    %505 = vrot.lane.b32.xlu0 %v503, 32
    %v506 = vpop.permute.xlu0 %505
    %v508 = vmul.f32 %v490, %v506
    %510 = vrot.lane.b32.xlu0 %v508, 64
    %v511 = vpop.permute.xlu0 %510
    %v512 = vsel %vm36, %v511, 0
    %514 = vmatpush.msra.mxu0 0.0
    %515 = vmatpush.msra.mxu0 0.0
    %516 = vmatpush.msra.mxu0 0.0
    %517 = vmatpush.msra.mxu0 0.0
    %518 = vmatpush.msra.mxu0 0.0
    %519 = vmatpush.msra.mxu0 0.0
    %520 = vmatpush.msra.mxu0 0.0
    %521 = vmatpush.msra.mxu0 0.0
    %522 = vmatpush.msra.mxu0 0.0
    %523 = vmatpush.msra.mxu0 0.0
    %524 = vmatpush.msra.mxu0 0.0
    %525 = vmatpush.msra.mxu0 0.0
    %526 = vmatpush.msra.mxu0 %v195
    %527 = vmatpush.msra.mxu0 %v194
    %528 = vmatpush.msra.mxu0 %v193
    %529 = vmatpush.msra.mxu0 %v192
    %530 = vmatmul.f32.gmra.mxu0 %v512
    %v531 = vpop.f32.mrf.mxu0
    %v532 = vadd.f32 0.0, %v531
    %533 = vdwg.mxu0
    %v534 = vadd.f32 %v184, %v532
    %v535 = vxor.u32 %v534, 2147483648
    %v536 = vmul.f32 %v535, 1.442695
    %v537 = vpow.pop %v536
    %v538 = vadd.f32 %v537, 1.0
    %v539 = vrcp.pop %v538
    %v540 = vmul.f32 %v538, %v539
    %v541 = vsub.f32 1.0, %v540
    %v542 = vmul.f32 %v539, %v541
    %v543 = vadd.f32 %v539, %v542
    %vm544 = vweird.f32 %v538
    %vm545 = vweird.f32 %v539
    %vm546 = vmor %vm544, %vm545
    %v547 = vsel %vm546, %v539, %v543
    %v548 = vand.u32 2147483647, %v538
    %vm549 = vcmp.eq.f32.partialorder %v548, 8.507059e+37
    %v550 = vand.u32 %v538, 2147483648
    %v551 = vor.u32 1.1754944e-38, %v550
    %v552 = vsel %vm549, %v551, %v547
    %v553 = vmul.f32 1.0, %v552
    %v554 = vtanh.pop %v534
    %v555 = vmul.f32 %v553, %v502
    %557 = vrot.lane.b32.xlu0 %v554, 32
    %v558 = vpop.permute.xlu0 %557
    %v560 = vmul.f32 %v553, %v558
    %562 = vrot.lane.b32.xlu0 %v560, 32
    %v563 = vpop.permute.xlu0 %562
    %v565 = vadd.f32 %v555, %v563
    %v566 = vtanh.pop %v565
    %568 = vrot.lane.b32.xlu0 %v566, 32
    %v569 = vpop.permute.xlu0 %568
    %v571 = vmul.f32 %v553, %v569
    %573 = vrot.lane.b32.xlu0 %v571, 64
    %v574 = vpop.permute.xlu0 %573
    %v575 = vsel %vm36, %v574, 0
    %577 = vmatpush.msra.mxu0 0.0
    %578 = vmatpush.msra.mxu0 0.0
    %579 = vmatpush.msra.mxu0 0.0
    %580 = vmatpush.msra.mxu0 0.0
    %581 = vmatpush.msra.mxu0 0.0
    %582 = vmatpush.msra.mxu0 0.0
    %583 = vmatpush.msra.mxu0 0.0
    %584 = vmatpush.msra.mxu0 0.0
    %585 = vmatpush.msra.mxu0 0.0
    %586 = vmatpush.msra.mxu0 0.0
    %587 = vmatpush.msra.mxu0 0.0
    %588 = vmatpush.msra.mxu0 0.0
    %589 = vmatpush.msra.mxu0 %v195
    %590 = vmatpush.msra.mxu0 %v194
    %591 = vmatpush.msra.mxu0 %v193
    %592 = vmatpush.msra.mxu0 %v192
    %593 = vmatmul.f32.gmra.mxu0 %v575
    %v594 = vpop.f32.mrf.mxu0
    %v595 = vadd.f32 0.0, %v594
    %596 = vdwg.mxu0
    %v597 = vadd.f32 %v187, %v595
    %v598 = vxor.u32 %v597, 2147483648
    %v599 = vmul.f32 %v598, 1.442695
    %v600 = vpow.pop %v599
    %v601 = vadd.f32 %v600, 1.0
    %v602 = vrcp.pop %v601
    %v603 = vmul.f32 %v601, %v602
    %v604 = vsub.f32 1.0, %v603
    %v605 = vmul.f32 %v602, %v604
    %v606 = vadd.f32 %v602, %v605
    %vm607 = vweird.f32 %v601
    %vm608 = vweird.f32 %v602
    %vm609 = vmor %vm607, %vm608
    %v610 = vsel %vm609, %v602, %v606
    %v611 = vand.u32 2147483647, %v601
    %vm612 = vcmp.eq.f32.partialorder %v611, 8.507059e+37
    %v613 = vand.u32 %v601, 2147483648
    %v614 = vor.u32 1.1754944e-38, %v613
    %v615 = vsel %vm612, %v614, %v610
    %v616 = vmul.f32 1.0, %v615
    %v617 = vtanh.pop %v597
    %v618 = vmul.f32 %v616, %v565
    %620 = vrot.lane.b32.xlu0 %v617, 32
    %v621 = vpop.permute.xlu0 %620
    %v623 = vmul.f32 %v616, %v621
    %625 = vrot.lane.b32.xlu0 %v623, 32
    %v626 = vpop.permute.xlu0 %625
    %v628 = vadd.f32 %v618, %v626
    %v629 = vtanh.pop %v628
    %631 = vrot.lane.b32.xlu0 %v629, 32
    %v632 = vpop.permute.xlu0 %631
    %v634 = vmul.f32 %v616, %v632
    %636 = vrot.lane.b32.xlu0 %v634, 64
    %v637 = vpop.permute.xlu0 %636
    %v638 = vsel %vm36, %v637, 0
    %640 = vmatpush.msra.mxu0 0.0
    %641 = vmatpush.msra.mxu0 0.0
    %642 = vmatpush.msra.mxu0 0.0
    %643 = vmatpush.msra.mxu0 0.0
    %644 = vmatpush.msra.mxu0 0.0
    %645 = vmatpush.msra.mxu0 0.0
    %646 = vmatpush.msra.mxu0 0.0
    %647 = vmatpush.msra.mxu0 0.0
    %648 = vmatpush.msra.mxu0 0.0
    %649 = vmatpush.msra.mxu0 0.0
    %650 = vmatpush.msra.mxu0 0.0
    %651 = vmatpush.msra.mxu0 0.0
    %652 = vmatpush.msra.mxu0 %v195
    %653 = vmatpush.msra.mxu0 %v194
    %654 = vmatpush.msra.mxu0 %v193
    %655 = vmatpush.msra.mxu0 %v192
    %656 = vmatmul.f32.gmra.mxu0 %v638
    %v657 = vpop.f32.mrf.mxu0
    %v658 = vadd.f32 0.0, %v657
    %659 = vdwg.mxu0
    %v660 = vadd.f32 %v190, %v658
    %v661 = vxor.u32 %v660, 2147483648
    %v662 = vmul.f32 %v661, 1.442695
    %v663 = vpow.pop %v662
    %v664 = vadd.f32 %v663, 1.0
    %v665 = vrcp.pop %v664
    %v666 = vmul.f32 %v664, %v665
    %v667 = vsub.f32 1.0, %v666
    %v668 = vmul.f32 %v665, %v667
    %v669 = vadd.f32 %v665, %v668
    %vm670 = vweird.f32 %v664
    %vm671 = vweird.f32 %v665
    %vm672 = vmor %vm670, %vm671
    %v673 = vsel %vm672, %v665, %v669
    %v674 = vand.u32 2147483647, %v664
    %vm675 = vcmp.eq.f32.partialorder %v674, 8.507059e+37
    %v676 = vand.u32 %v664, 2147483648
    %v677 = vor.u32 1.1754944e-38, %v676
    %v678 = vsel %vm675, %v677, %v673
    %v679 = vmul.f32 1.0, %v678
    %v680 = vtanh.pop %v660
    %v681 = vmul.f32 %v679, %v628
    %683 = vrot.lane.b32.xlu0 %v680, 32
    %v684 = vpop.permute.xlu0 %683
    %v686 = vmul.f32 %v679, %v684
    %688 = vrot.lane.b32.xlu0 %v686, 32
    %v689 = vpop.permute.xlu0 %688
    %v691 = vadd.f32 %v681, %v689
    %v692 = vtanh.pop %v691
    %694 = vrot.lane.b32.xlu0 %v692, 32
    %v695 = vpop.permute.xlu0 %694
    %v697 = vmul.f32 %v679, %v695
    %v698 = vld [vmem:[#allocation2 + $0xe0] sm:$0xff]
    %v699 = vld [vmem:[#allocation2 + $0xe8] sm:$0xff]
    %s700 = scalar_lea.vmem [#allocation2], 964
    %v701 = vld [vmem:[%s700] ss:$8 sm:$0x3]
    %v703 = vperm.slane %v701, 0
    %v704 = vperm.slane %v701, 1
    %v708 = vsel %vm63, %v113, 0
    %710 = vmatpush.msra.mxu0 0.0
    %711 = vmatpush.msra.mxu0 0.0
    %712 = vmatpush.msra.mxu0 0.0
    %713 = vmatpush.msra.mxu0 0.0
    %714 = vmatpush.msra.mxu0 0.0
    %715 = vmatpush.msra.mxu0 0.0
    %716 = vmatpush.msra.mxu0 0.0
    %717 = vmatpush.msra.mxu0 0.0
    %718 = vmatpush.msra.mxu0 0.0
    %719 = vmatpush.msra.mxu0 0.0
    %720 = vmatpush.msra.mxu0 0.0
    %721 = vmatpush.msra.mxu0 0.0
    %722 = vmatpush.msra.mxu0 0.0
    %723 = vmatpush.msra.mxu0 0.0
    %724 = vmatpush.msra.mxu0 0.0
    %725 = vmatpush.msra.mxu0 %v698
    %726 = vmatmul.f32.gmra.mxu0 %v708
    %v727 = vpop.f32.mrf.mxu0
    %v728 = vadd.f32 %v703, %v727
    %729 = vdwg.mxu0
    %730 = vmatpush.msra.mxu0 0.0
    %731 = vmatpush.msra.mxu0 0.0
    %732 = vmatpush.msra.mxu0 0.0
    %733 = vmatpush.msra.mxu0 0.0
    %734 = vmatpush.msra.mxu0 0.0
    %735 = vmatpush.msra.mxu0 0.0
    %736 = vmatpush.msra.mxu0 0.0
    %737 = vmatpush.msra.mxu0 0.0
    %738 = vmatpush.msra.mxu0 0.0
    %739 = vmatpush.msra.mxu0 0.0
    %740 = vmatpush.msra.mxu0 0.0
    %741 = vmatpush.msra.mxu0 0.0
    %742 = vmatpush.msra.mxu0 0.0
    %743 = vmatpush.msra.mxu0 0.0
    %744 = vmatpush.msra.mxu0 0.0
    %745 = vmatpush.msra.mxu0 %v699
    %746 = vmatmul.f32.gmra.mxu0 %v708
    %v747 = vpop.f32.mrf.mxu0
    %v748 = vadd.f32 %v704, %v747
    %749 = vdwg.mxu0
    %v750 = vld [vmem:[#allocation2 + $0xf0] sm:$0xff]
    %v751 = vld [vmem:[#allocation2 + $0xf8] sm:$0xff]
    %s752 = scalar_lea.vmem [#allocation2], 965
    %v753 = vld [vmem:[%s752] ss:$8 sm:$0x3]
    %v755 = vperm.slane %v753, 0
    %v756 = vperm.slane %v753, 1
    %759 = vmatpush.msra.mxu0 0.0
    %760 = vmatpush.msra.mxu0 0.0
    %761 = vmatpush.msra.mxu0 0.0
    %762 = vmatpush.msra.mxu0 0.0
    %763 = vmatpush.msra.mxu0 0.0
    %764 = vmatpush.msra.mxu0 0.0
    %765 = vmatpush.msra.mxu0 0.0
    %766 = vmatpush.msra.mxu0 0.0
    %767 = vmatpush.msra.mxu0 0.0
    %768 = vmatpush.msra.mxu0 0.0
    %769 = vmatpush.msra.mxu0 0.0
    %770 = vmatpush.msra.mxu0 0.0
    %771 = vmatpush.msra.mxu0 0.0
    %772 = vmatpush.msra.mxu0 0.0
    %773 = vmatpush.msra.mxu0 0.0
    %774 = vmatpush.msra.mxu0 %v750
    %775 = vmatmul.f32.gmra.mxu0 %v708
    %v776 = vpop.f32.mrf.mxu0
    %v777 = vadd.f32 %v755, %v776
    %778 = vdwg.mxu0
    %779 = vmatpush.msra.mxu0 0.0
    %780 = vmatpush.msra.mxu0 0.0
    %781 = vmatpush.msra.mxu0 0.0
    %782 = vmatpush.msra.mxu0 0.0
    %783 = vmatpush.msra.mxu0 0.0
    %784 = vmatpush.msra.mxu0 0.0
    %785 = vmatpush.msra.mxu0 0.0
    %786 = vmatpush.msra.mxu0 0.0
    %787 = vmatpush.msra.mxu0 0.0
    %788 = vmatpush.msra.mxu0 0.0
    %789 = vmatpush.msra.mxu0 0.0
    %790 = vmatpush.msra.mxu0 0.0
    %791 = vmatpush.msra.mxu0 0.0
    %792 = vmatpush.msra.mxu0 0.0
    %793 = vmatpush.msra.mxu0 0.0
    %794 = vmatpush.msra.mxu0 %v751
    %795 = vmatmul.f32.gmra.mxu0 %v708
    %v796 = vpop.f32.mrf.mxu0
    %v797 = vadd.f32 %v756, %v796
    %798 = vdwg.mxu0
    %v799 = vld [vmem:[#allocation2 + $0x100] sm:$0xff]
    %v800 = vld [vmem:[#allocation2 + $0x108] sm:$0xff]
    %v801 = vld [vmem:[#allocation2 + $0x110] sm:$0xff]
    %v802 = vld [vmem:[#allocation2 + $0x118] sm:$0xff]
    %v803 = vld [vmem:[#allocation2 + $0x120] sm:$0xff]
    %v804 = vld [vmem:[#allocation2 + $0x128] sm:$0xff]
    %v805 = vld [vmem:[#allocation2 + $0x130] sm:$0xff]
    %v806 = vld [vmem:[#allocation2 + $0x138] sm:$0xff]
    %s807 = scalar_lea.vmem [#allocation2], 966
    %v808 = vld [vmem:[%s807] ss:$8 sm:$0x3]
    %v810 = vperm.slane %v808, 0
    %v811 = vperm.slane %v808, 1
    %815 = vrot.lane.b32.xlu0 %v697, 64
    %v816 = vpop.permute.xlu0 %815
    %v817 = vsel %vm36, %v816, 0
    %819 = vmatpush.msra.mxu0 0.0
    %820 = vmatpush.msra.mxu0 0.0
    %821 = vmatpush.msra.mxu0 0.0
    %822 = vmatpush.msra.mxu0 0.0
    %823 = vmatpush.msra.mxu0 0.0
    %824 = vmatpush.msra.mxu0 0.0
    %825 = vmatpush.msra.mxu0 0.0
    %826 = vmatpush.msra.mxu0 0.0
    %827 = vmatpush.msra.mxu0 0.0
    %828 = vmatpush.msra.mxu0 0.0
    %829 = vmatpush.msra.mxu0 0.0
    %830 = vmatpush.msra.mxu0 0.0
    %831 = vmatpush.msra.mxu0 %v805
    %832 = vmatpush.msra.mxu0 %v803
    %833 = vmatpush.msra.mxu0 %v801
    %834 = vmatpush.msra.mxu0 %v799
    %835 = vmatmul.f32.gmra.mxu0 %v817
    %v836 = vpop.f32.mrf.mxu0
    %v837 = vadd.f32 %v810, %v836
    %838 = vdwg.mxu0
    %839 = vmatpush.msra.mxu0 0.0
    %840 = vmatpush.msra.mxu0 0.0
    %841 = vmatpush.msra.mxu0 0.0
    %842 = vmatpush.msra.mxu0 0.0
    %843 = vmatpush.msra.mxu0 0.0
    %844 = vmatpush.msra.mxu0 0.0
    %845 = vmatpush.msra.mxu0 0.0
    %846 = vmatpush.msra.mxu0 0.0
    %847 = vmatpush.msra.mxu0 0.0
    %848 = vmatpush.msra.mxu0 0.0
    %849 = vmatpush.msra.mxu0 0.0
    %850 = vmatpush.msra.mxu0 0.0
    %851 = vmatpush.msra.mxu0 %v806
    %852 = vmatpush.msra.mxu0 %v804
    %853 = vmatpush.msra.mxu0 %v802
    %854 = vmatpush.msra.mxu0 %v800
    %855 = vmatmul.f32.gmra.mxu0 %v817
    %v856 = vpop.f32.mrf.mxu0
    %v857 = vadd.f32 %v811, %v856
    %858 = vdwg.mxu0
    %v859 = vmul.f32 %v728, %v777
    %v860 = vmul.f32 %v748, %v797
    %v861 = vmul.f32 %v859, %v837
    %v862 = vmul.f32 %v860, %v857
    %v863 = vld [vmem:[#allocation2 + $0x140] sm:$0xff]
    %v864 = vld [vmem:[#allocation2 + $0x150] sm:$0xff]
    %v865 = vld [vmem:[#allocation2 + $0x160] sm:$0xff]
    %v866 = vld [vmem:[#allocation2 + $0x170] sm:$0xff]
    %v867 = vld [vmem:[#allocation2 + $0x180] sm:$0xff]
    %v868 = vld [vmem:[#allocation2 + $0x190] sm:$0xff]
    %v869 = vld [vmem:[#allocation2 + $0x1a0] sm:$0xff]
    %v870 = vld [vmem:[#allocation2 + $0x1b0] sm:$0xff]
    %v871 = vld [vmem:[#allocation2 + $0x1c0] sm:$0xff]
    %v872 = vld [vmem:[#allocation2 + $0x1d0] sm:$0xff]
    %v873 = vld [vmem:[#allocation2 + $0x1e0] sm:$0xff]
    %v874 = vld [vmem:[#allocation2 + $0x1f0] sm:$0xff]
    %v875 = vld [vmem:[#allocation2 + $0x200] sm:$0xff]
    %v876 = vld [vmem:[#allocation2 + $0x210] sm:$0xff]
    %v877 = vld [vmem:[#allocation2 + $0x220] sm:$0xff]
    %v878 = vld [vmem:[#allocation2 + $0x230] sm:$0xff]
    %v879 = vld [vmem:[#allocation2 + $0x240] sm:$0xff]
    %v880 = vld [vmem:[#allocation2 + $0x250] sm:$0xff]
    %v881 = vld [vmem:[#allocation2 + $0x260] sm:$0xff]
    %v882 = vld [vmem:[#allocation2 + $0x270] sm:$0xff]
    %v883 = vld [vmem:[#allocation2 + $0x280] sm:$0xff]
    %v884 = vld [vmem:[#allocation2 + $0x290] sm:$0xff]
    %v885 = vld [vmem:[#allocation2 + $0x2a0] sm:$0xff]
    %v886 = vld [vmem:[#allocation2 + $0x2b0] sm:$0xff]
    %v887 = vld [vmem:[#allocation2 + $0x2c0] sm:$0xff]
    %v888 = vld [vmem:[#allocation2 + $0x2d0] sm:$0xff]
    %v889 = vld [vmem:[#allocation2 + $0x2e0] sm:$0xff]
    %v890 = vld [vmem:[#allocation2 + $0x2f0] sm:$0xff]
    %v891 = vld [vmem:[#allocation2 + $0x300] sm:$0xff]
    %v892 = vld [vmem:[#allocation2 + $0x310] sm:$0xff]
    %v893 = vld [vmem:[#allocation2 + $0x320] sm:$0xff]
    %v894 = vld [vmem:[#allocation2 + $0x330] sm:$0xff]
    %v895 = vld [vmem:[#allocation2 + $0x3c7] ss:$0 sm:$0xff]
    %896 = vmatpush.msra.mxu0 %v878
    %897 = vmatpush.msra.mxu0 %v877
    %898 = vmatpush.msra.mxu0 %v876
    %899 = vmatpush.msra.mxu0 %v875
    %900 = vmatpush.msra.mxu0 %v874
    %901 = vmatpush.msra.mxu0 %v873
    %902 = vmatpush.msra.mxu0 %v872
    %903 = vmatpush.msra.mxu0 %v871
    %904 = vmatpush.msra.mxu0 %v870
    %905 = vmatpush.msra.mxu0 %v869
    %906 = vmatpush.msra.mxu0 %v868
    %907 = vmatpush.msra.mxu0 %v867
    %908 = vmatpush.msra.mxu0 %v866
    %909 = vmatpush.msra.mxu0 %v865
    %910 = vmatpush.msra.mxu0 %v864
    %911 = vmatpush.msra.mxu0 %v863
    %912 = vmatmul.f32.gmra.mxu0 %v861
    %v913 = vpop.f32.mrf.mxu0
    %v914 = vadd.f32 %v895, %v913
    %915 = vdwg.mxu0
    %916 = vmatpush.msra.mxu0 %v894
    %917 = vmatpush.msra.mxu0 %v893
    %918 = vmatpush.msra.mxu0 %v892
    %919 = vmatpush.msra.mxu0 %v891
    %920 = vmatpush.msra.mxu0 %v890
    %921 = vmatpush.msra.mxu0 %v889
    %922 = vmatpush.msra.mxu0 %v888
    %923 = vmatpush.msra.mxu0 %v887
    %924 = vmatpush.msra.mxu0 %v886
    %925 = vmatpush.msra.mxu0 %v885
    %926 = vmatpush.msra.mxu0 %v884
    %927 = vmatpush.msra.mxu0 %v883
    %928 = vmatpush.msra.mxu0 %v882
    %929 = vmatpush.msra.mxu0 %v881
    %930 = vmatpush.msra.mxu0 %v880
    %931 = vmatpush.msra.mxu0 %v879
    %932 = vmatmul.f32.gmra.mxu0 %v862
    %v933 = vpop.f32.mrf.mxu0
    %v934 = vadd.f32 %v914, %v933
    %935 = vdwg.mxu0
    %v936 = vmax.f32 %v934, 0.0
    %v937 = vld [vmem:[#allocation2 + $0x340] sm:$0xff]
    %v938 = vld [vmem:[#allocation2 + $0x350] sm:$0xff]
    %v939 = vld [vmem:[#allocation2 + $0x360] sm:$0xff]
    %v940 = vld [vmem:[#allocation2 + $0x370] sm:$0xff]
    %v941 = vld [vmem:[#allocation2 + $0x3d0] ss:$0 sm:$0xff]
    %v943 = vsel %vm36, %v936, 0
    %945 = vmatpush.msra.mxu0 0.0
    %946 = vmatpush.msra.mxu0 0.0
    %947 = vmatpush.msra.mxu0 0.0
    %948 = vmatpush.msra.mxu0 0.0
    %949 = vmatpush.msra.mxu0 0.0
    %950 = vmatpush.msra.mxu0 0.0
    %951 = vmatpush.msra.mxu0 0.0
    %952 = vmatpush.msra.mxu0 0.0
    %953 = vmatpush.msra.mxu0 0.0
    %954 = vmatpush.msra.mxu0 0.0
    %955 = vmatpush.msra.mxu0 0.0
    %956 = vmatpush.msra.mxu0 0.0
    %957 = vmatpush.msra.mxu0 %v940
    %958 = vmatpush.msra.mxu0 %v939
    %959 = vmatpush.msra.mxu0 %v938
    %960 = vmatpush.msra.mxu0 %v937
    %961 = vmatmul.f32.gmra.mxu0 %v943
    %v962 = vpop.f32.mrf.mxu0
    %v963 = vadd.f32 %v941, %v962
    %964 = vdwg.mxu0
    %v965 = vmax.f32 %v963, 0.0
    %v966 = vld [vmem:[#allocation2 + $0x380] sm:$0xff]
    %v967 = vld [vmem:[#allocation2 + $0x390] sm:$0xff]
    %v968 = vld [vmem:[#allocation2 + $0x3a0] sm:$0xff]
    %v969 = vld [vmem:[#allocation2 + $0x3b0] sm:$0xff]
    %v970 = vld [vmem:[#allocation2 + $0x3d1] ss:$0 sm:$0xff]
    %v972 = vsel %vm36, %v965, 0
    %974 = vmatpush.msra.mxu0 0.0
    %975 = vmatpush.msra.mxu0 0.0
    %976 = vmatpush.msra.mxu0 0.0
    %977 = vmatpush.msra.mxu0 0.0
    %978 = vmatpush.msra.mxu0 0.0
    %979 = vmatpush.msra.mxu0 0.0
    %980 = vmatpush.msra.mxu0 0.0
    %981 = vmatpush.msra.mxu0 0.0
    %982 = vmatpush.msra.mxu0 0.0
    %983 = vmatpush.msra.mxu0 0.0
    %984 = vmatpush.msra.mxu0 0.0
    %985 = vmatpush.msra.mxu0 0.0
    %986 = vmatpush.msra.mxu0 %v969
    %987 = vmatpush.msra.mxu0 %v968
    %988 = vmatpush.msra.mxu0 %v967
    %989 = vmatpush.msra.mxu0 %v966
    %990 = vmatmul.f32.gmra.mxu0 %v972
    %v991 = vpop.f32.mrf.mxu0
    %v992 = vadd.f32 %v970, %v991
    %993 = vdwg.mxu0
    %v994 = vxor.u32 %v992, 2147483648
    %v995 = vmul.f32 %v994, 1.442695
    %v996 = vpow.pop %v995
    %v997 = vadd.f32 %v996, 1.0
    %v998 = vrcp.pop %v997
    %v999 = vmul.f32 %v997, %v998
    %v1000 = vsub.f32 1.0, %v999
    %v1001 = vmul.f32 %v998, %v1000
    %v1002 = vadd.f32 %v998, %v1001
    %vm1003 = vweird.f32 %v997
    %vm1004 = vweird.f32 %v998
    %vm1005 = vmor %vm1003, %vm1004
    %v1006 = vsel %vm1005, %v998, %v1002
    %v1007 = vand.u32 2147483647, %v997
    %vm1008 = vcmp.eq.f32.partialorder %v1007, 8.507059e+37
    %v1009 = vand.u32 %v997, 2147483648
    %v1010 = vor.u32 1.1754944e-38, %v1009
    %v1011 = vsel %vm1008, %v1010, %v1006
    %v1012 = vmul.f32 1.0, %v1011
    %v1013 = vmul.f32 %v1012, 6.0
    %v1014 = vadd.f32 %v1013, -3.0
    %1015 = vst [vmem:[%s3] sm:$0xff] %v1014
    // Predicated region
    $region18: #{tfn_forward.1} parent=1 // pred_check
      _
    $region19: #{tfn_forward.1} parent=1 // pred_check_branch
      %1017 = sbr.rel (0) target = $region21
    $region20: #{tfn_forward.1} parent=1 // pred_region
      _
    $region21: #{tfn_forward.1} parent=1 // pred_fallthru
      _
    // Predicated region
    $region22: #{tfn_forward.1} parent=1 // pred_check
      _
    $region23: #{tfn_forward.1} parent=1 // pred_check_branch
      %1019 = sbr.rel (0) target = $region25
    $region24: #{tfn_forward.1} parent=1 // pred_region
      _
    $region25: #{tfn_forward.1} parent=1 // pred_fallthru
      _
    %1020 = vsyncpa [#allocation3], 1

</llo_original>
